<compile_context>
chip_gen: v7x
topology: tpu7x:2x2x1
jax: 0.10.0
libtpu: 0.0.40
codegen_flags: <defaults>
</compile_context>

<pallas_src>
import functools

import jax
import jax.numpy as jnp
from jax.experimental import pallas as pl
from jax.experimental.pallas import tpu as pltpu

LANES = 128          # lane width (last dim of a vreg)
SUBLANES = 8         # sublane height of one f32 vreg
ROW_GRANULE = 16     # row-tile granule; valid for f32 (8) and bf16 (16) packing
MAX_ROW_TILE = 4096  # 4096 x 128 f32 = 2 MiB per input block
SMALL_N = 1 << 16    # below this, plain XLA beats pallas_call launch overhead


def _num_tensorcores():
    """Best-effort TensorCore count per device (v7x: 2, v5e/v6e: 1)."""
    try:
        dev = jax.devices()[0]
    except Exception:
        return 1
    for attr in ("num_cores", "core_count"):
        val = getattr(dev, attr, None)
        if val is None:
            continue
        try:
            val = int(val)
        except (TypeError, ValueError):
            continue
        if val > 0:
            return min(val, 2)
    return 1


def _iou_kernel(logit_ref, target_ref, inter_ref, sum_ref, *,
                row_tile, tiles_per_shard, full_tiles, rem_rows):
    s = pl.program_id(0)          # TensorCore shard (CORE_PARALLEL on v7x)
    j = pl.program_id(1)          # row-tile index within shard (reduction axis)
    gidx = s * tiles_per_shard + j

    # Output blocks are VMEM-resident across the j axis (same block index),
    # so they double as per-shard accumulators.  Initialize once per shard.
    @pl.when(j == 0)
    def _():
        inter_ref[...] = jnp.zeros_like(inter_ref)
        sum_ref[...] = jnp.zeros_like(sum_ref)

    # Native-dtype DMA; cast to f32 on the VPU (free under the HBM-bound DMA).
    x = logit_ref[...].astype(jnp.float32)
    t = target_ref[...].astype(jnp.float32)
    o = jax.nn.sigmoid(x)         # exact; exp runs on the EUP slot

    groups = row_tile // SUBLANES  # static

    @pl.when(gidx < full_tiles)
    def _():
        # Full tile: pure VPU vreg-wise adds into the (8,128) accumulators.
        inter_ref[...] += jnp.sum((o * t).reshape(groups, SUBLANES, LANES), axis=0)
        sum_ref[...] += jnp.sum((o + t).reshape(groups, SUBLANES, LANES), axis=0)

    if rem_rows > 0:              # static: only emitted if a ragged row tile exists
        @pl.when(gidx == full_tiles)
        def _():
            # Last (partial) row tile: rows >= rem_rows are edge-block garbage.
            rid = jax.lax.broadcasted_iota(jnp.int32, (row_tile, LANES), 0)
            mask = (rid < rem_rows).reshape(groups, SUBLANES, LANES)
            inter_ref[...] += jnp.sum(
                jnp.where(mask, (o * t).reshape(groups, SUBLANES, LANES), 0.0),
                axis=0)
            sum_ref[...] += jnp.sum(
                jnp.where(mask, (o + t).reshape(groups, SUBLANES, LANES), 0.0),
                axis=0)
    # gidx > full_tiles (padded grid steps from shard rounding) contribute nothing.


def iou_loss(output, target, eps=1e-06):
    assert output.shape == target.shape, "channel is not equal"

    out_flat = output.reshape(-1)     # free bitcast (row-major contiguous)
    tgt_flat = target.reshape(-1)
    n = out_flat.shape[0]

    # ---- Small-input fast path ------------------------------------------
    if n < SMALL_N:
        o = jax.nn.sigmoid(out_flat.astype(jnp.float32))
        t = tgt_flat.astype(jnp.float32)
        inter = jnp.sum(o * t)
        union = jnp.sum(o) + jnp.sum(t) - inter + eps
        return 1.0 - inter / union

    # ---- Split off the (<128 element) lane-unaligned tail ----------------
    rows = n // LANES
    n_main = rows * LANES
    tail_inter = jnp.float32(0.0)
    tail_sum = jnp.float32(0.0)
    if n_main != n:
        # Tiny plain-XLA reduction of the ragged tail (at most 127 elements).
        # TODO(synk): the aligned-prefix slice below may still copy in this
        # rare unaligned case; a 1-D BlockSpec feed would avoid it entirely.
        o_t = jax.nn.sigmoid(out_flat[n_main:].astype(jnp.float32))
        t_t = tgt_flat[n_main:].astype(jnp.float32)
        tail_inter = jnp.sum(o_t * t_t)
        tail_sum = jnp.sum(o_t) + jnp.sum(t_t)
        out_flat = out_flat[:n_main]
        tgt_flat = tgt_flat[:n_main]

    out2d = out_flat.reshape(rows, LANES)   # free bitcast when already aligned
    tgt2d = tgt_flat.reshape(rows, LANES)

    # ---- Tiling -----------------------------------------------------------
    if rows >= MAX_ROW_TILE:
        row_tile = MAX_ROW_TILE
    else:
        row_tile = (rows // ROW_GRANULE) * ROW_GRANULE  # >= 512 given SMALL_N
    n_tiles = pl.cdiv(rows, row_tile)
    full_tiles = rows // row_tile           # static, tiles needing no mask
    rem_rows = rows % row_tile              # static, rows in the ragged tile

    num_shards = _num_tensorcores()
    if n_tiles < 2 * num_shards:            # not worth core-sharding
        num_shards = 1
    tps = pl.cdiv(n_tiles, num_shards)      # tiles per shard

    def in_map(s, j):
        # Clamp so padded grid steps (shard rounding) never DMA out of range;
        # their contribution is skipped inside the kernel.
        return (jnp.minimum(s * tps + j, n_tiles - 1), 0)

    kernel = functools.partial(
        _iou_kernel, row_tile=row_tile, tiles_per_shard=tps,
        full_tiles=full_tiles, rem_rows=rem_rows)

    shard_sem = pltpu.CORE_PARALLEL if num_shards > 1 else pltpu.ARBITRARY

    inter_p, sum_p = pl.pallas_call(
        kernel,
        out_shape=(
            jax.ShapeDtypeStruct((num_shards * SUBLANES, LANES), jnp.float32),
            jax.ShapeDtypeStruct((num_shards * SUBLANES, LANES), jnp.float32),
        ),
        grid_spec=pltpu.PrefetchScalarGridSpec(
            num_scalar_prefetch=0,
            grid=(num_shards, tps),
            in_specs=[
                pl.BlockSpec((row_tile, LANES), in_map),
                pl.BlockSpec((row_tile, LANES), in_map),
            ],
            out_specs=[
                pl.BlockSpec((SUBLANES, LANES), lambda s, j: (s, 0)),
                pl.BlockSpec((SUBLANES, LANES), lambda s, j: (s, 0)),
            ],
        ),
        compiler_params=pltpu.CompilerParams(
            dimension_semantics=(shard_sem, pltpu.ARBITRARY),
            vmem_limit_bytes=48 << 20),
    )(out2d, tgt2d)

    inter = jnp.sum(inter_p) + tail_inter
    total = jnp.sum(sum_p) + tail_sum       # = sum(sigmoid(x)) + sum(target)
    union = total - inter + eps
    return 1.0 - inter / union


def _iou_loss_ref(output, target, eps=1e-06):
    o = jax.nn.sigmoid(output.astype(jnp.float32))
    t = target.astype(jnp.float32)
    inter = jnp.sum(o * t)
    union = jnp.sum(o) + jnp.sum(t) - inter + eps
    return 1.0 - inter / union


if __name__ == "__main__":
    key = jax.random.PRNGKey(0)
    k1, k2, k3, k4, k5, k6, k7, k8 = jax.random.split(key, 8)

    # 1) Small NCHW input consistent with the module (fast path).
    out_s = jax.random.normal(k1, (2, 4, 16, 16), dtype=jnp.float32)
    tgt_s = (jax.random.uniform(k2, (2, 4, 16, 16)) > 0.5).astype(jnp.float32)
    loss_s = jax.block_until_ready(iou_loss(out_s, tgt_s))
    ref_s = jax.block_until_ready(_iou_loss_ref(out_s, tgt_s))
    assert jnp.allclose(loss_s, ref_s, atol=1e-5, rtol=1e-5), (loss_s, ref_s)

    # 2) Lane-aligned input large enough to take the Pallas path (1 tile).
    out_l = jax.random.normal(k3, (2, 4, 128, 128), dtype=jnp.float32)
    tgt_l = (jax.random.uniform(k4, (2, 4, 128, 128)) > 0.5).astype(jnp.float32)
    loss_l = jax.block_until_ready(iou_loss(out_l, tgt_l))
    ref_l = jax.block_until_ready(_iou_loss_ref(out_l, tgt_l))
    assert jnp.allclose(loss_l, ref_l, atol=1e-5, rtol=1e-5), (loss_l, ref_l)

    # 3) Lane-unaligned shape -> exercises the wrapper lane-tail reduction
    #    and the in-kernel ragged-row mask.
    out_u = jax.random.normal(k5, (3, 5, 129, 67), dtype=jnp.float32)
    tgt_u = (jax.random.uniform(k6, (3, 5, 129, 67)) > 0.5).astype(jnp.float32)
    loss_u = jax.block_until_ready(iou_loss(out_u, tgt_u))
    ref_u = jax.block_until_ready(_iou_loss_ref(out_u, tgt_u))
    assert jnp.allclose(loss_u, ref_u, atol=1e-5, rtol=1e-5), (loss_u, ref_u)

    # 4) Multi-tile input at the maximum (4096-row) block size -> exercises
    #    accumulation across grid steps and the partial last row tile.
    out_m = jax.random.normal(k7, (2, 4, 320, 320), dtype=jnp.float32)
    tgt_m = (jax.random.uniform(k8, (2, 4, 320, 320)) > 0.5).astype(jnp.float32)
    loss_m = jax.block_until_ready(iou_loss(out_m, tgt_m))
    ref_m = jax.block_until_ready(_iou_loss_ref(out_m, tgt_m))
    assert jnp.allclose(loss_m, ref_m, atol=1e-5, rtol=1e-5), (loss_m, ref_m)

    print("KERNEL_OK")
</pallas_src>

<mosaic_0001>
module attributes {stable_mosaic.version = 11 : i64} {
  func.func @_iou_kernel(%arg0: i32, %arg1: i32, %arg2: memref<1024x128xf32, #tpu.memory_space<vmem>>, %arg3: memref<1024x128xf32, #tpu.memory_space<vmem>>, %arg4: memref<8x128xf32, #tpu.memory_space<vmem>>, %arg5: memref<8x128xf32, #tpu.memory_space<vmem>>) attributes {dimension_semantics = [#tpu.dimension_semantics<arbitrary>, #tpu.dimension_semantics<arbitrary>], iteration_bounds = array<i64: 1, 1>, scalar_prefetch = 0 : i64, scratch_operands = 0 : i64, tpu.core_type = #tpu.core_type<tc>, window_params = [{transform_indices = @transform_0, window_bounds = array<i64: 1024, 128>}, {transform_indices = @transform_1, window_bounds = array<i64: 1024, 128>}, {transform_indices = @transform_2, window_bounds = array<i64: 8, 128>}, {transform_indices = @transform_3, window_bounds = array<i64: 8, 128>}]} {
    %c1_i32 = arith.constant 1 : i32
    %0 = arith.muli %arg0, %c1_i32 : i32
    %1 = arith.addi %0, %arg1 : i32
    %c0_i32 = arith.constant 0 : i32
    %2 = arith.cmpi eq, %arg1, %c0_i32 : i32
    %3 = arith.extui %2 : i1 to i32
    %c0_i32_0 = arith.constant 0 : i32
    %4 = arith.cmpi ne, %3, %c0_i32_0 : i32
    scf.if %4 {
      %cst_6 = arith.constant 0.000000e+00 : f32
      %15 = vector.broadcast %cst_6 : f32 to vector<8x128xf32>
      %c0_7 = arith.constant 0 : index
      %c0_8 = arith.constant 0 : index
      %16 = vector.load %arg4[%c0_7, %c0_8] : memref<8x128xf32, #tpu.memory_space<vmem>>, vector<8x128xf32>
      tpu.vector_store %arg4[%c0_7, %c0_8], %15 {strides = array<i32>} : memref<8x128xf32, #tpu.memory_space<vmem>>, vector<8x128xf32>,
      %cst_9 = arith.constant 0.000000e+00 : f32
      %17 = vector.broadcast %cst_9 : f32 to vector<8x128xf32>
      %c0_10 = arith.constant 0 : index
      %c0_11 = arith.constant 0 : index
      %18 = vector.load %arg5[%c0_10, %c0_11] : memref<8x128xf32, #tpu.memory_space<vmem>>, vector<8x128xf32>
      tpu.vector_store %arg5[%c0_10, %c0_11], %17 {strides = array<i32>} : memref<8x128xf32, #tpu.memory_space<vmem>>, vector<8x128xf32>,
    } else {
    }
    %c0 = arith.constant 0 : index
    %c0_1 = arith.constant 0 : index
    %5 = vector.load %arg2[%c0, %c0_1] : memref<1024x128xf32, #tpu.memory_space<vmem>>, vector<1024x128xf32>
    %c0_2 = arith.constant 0 : index
    %c0_3 = arith.constant 0 : index
    %6 = vector.load %arg3[%c0_2, %c0_3] : memref<1024x128xf32, #tpu.memory_space<vmem>>, vector<1024x128xf32>
    %7 = arith.negf %5 : vector<1024x128xf32>
    %8 = math.exp %7 : vector<1024x128xf32>
    %cst = arith.constant 1.000000e+00 : f32
    %9 = vector.broadcast %cst : f32 to vector<1024x128xf32>
    %10 = arith.addf %9, %8 : vector<1024x128xf32>
    %11 = arith.divf %9, %10 : vector<1024x128xf32>
    %c1_i32_4 = arith.constant 1 : i32
    %12 = arith.cmpi slt, %1, %c1_i32_4 : i32
    %13 = arith.extui %12 : i1 to i32
    %c0_i32_5 = arith.constant 0 : i32
    %14 = arith.cmpi ne, %13, %c0_i32_5 : i32
    scf.if %14 {
      %c0_6 = arith.constant 0 : index
      %c0_7 = arith.constant 0 : index
      %15 = vector.load %arg4[%c0_6, %c0_7] : memref<8x128xf32, #tpu.memory_space<vmem>>, vector<8x128xf32>
      %16 = arith.mulf %11, %6 : vector<1024x128xf32>
      %17 = vector.shape_cast %16 : vector<1024x128xf32> to vector<128x8x128xf32>
      %cst_8 = arith.constant dense<0.000000e+00> : vector<8x128xf32>
      %18 = vector.multi_reduction <add>, %17, %cst_8 [0] : vector<128x8x128xf32> to vector<8x128xf32>
      %19 = arith.addf %15, %18 : vector<8x128xf32>
      %c0_9 = arith.constant 0 : index
      %c0_10 = arith.constant 0 : index
      %20 = vector.load %arg4[%c0_9, %c0_10] : memref<8x128xf32, #tpu.memory_space<vmem>>, vector<8x128xf32>
      tpu.vector_store %arg4[%c0_9, %c0_10], %19 {strides = array<i32>} : memref<8x128xf32, #tpu.memory_space<vmem>>, vector<8x128xf32>,
      %c0_11 = arith.constant 0 : index
      %c0_12 = arith.constant 0 : index
      %21 = vector.load %arg5[%c0_11, %c0_12] : memref<8x128xf32, #tpu.memory_space<vmem>>, vector<8x128xf32>
      %22 = arith.addf %11, %6 : vector<1024x128xf32>
      %23 = vector.shape_cast %22 : vector<1024x128xf32> to vector<128x8x128xf32>
      %cst_13 = arith.constant dense<0.000000e+00> : vector<8x128xf32>
      %24 = vector.multi_reduction <add>, %23, %cst_13 [0] : vector<128x8x128xf32> to vector<8x128xf32>
      %25 = arith.addf %21, %24 : vector<8x128xf32>
      %c0_14 = arith.constant 0 : index
      %c0_15 = arith.constant 0 : index
      %26 = vector.load %arg5[%c0_14, %c0_15] : memref<8x128xf32, #tpu.memory_space<vmem>>, vector<8x128xf32>
      tpu.vector_store %arg5[%c0_14, %c0_15], %25 {strides = array<i32>} : memref<8x128xf32, #tpu.memory_space<vmem>>, vector<8x128xf32>,
    } else {
    }
    return
  }
  func.func @transform_0(%arg0: i32, %arg1: i32) -> (i32, i32) {
    %c1_i32 = arith.constant 1 : i32
    %0 = arith.muli %arg0, %c1_i32 : i32
    %1 = arith.addi %0, %arg1 : i32
    %c0_i32 = arith.constant 0 : i32
    %2 = arith.minsi %1, %c0_i32 : i32
    %c0_i32_0 = arith.constant 0 : i32
    %c0_i32_1 = arith.constant 0 : i32
    return %2, %c0_i32_0 : i32, i32
  }
  func.func @transform_1(%arg0: i32, %arg1: i32) -> (i32, i32) {
    %c1_i32 = arith.constant 1 : i32
    %0 = arith.muli %arg0, %c1_i32 : i32
    %1 = arith.addi %0, %arg1 : i32
    %c0_i32 = arith.constant 0 : i32
    %2 = arith.minsi %1, %c0_i32 : i32
    %c0_i32_0 = arith.constant 0 : i32
    %c0_i32_1 = arith.constant 0 : i32
    return %2, %c0_i32_0 : i32, i32
  }
  func.func @transform_2(%arg0: i32, %arg1: i32) -> (i32, i32) {
    %c0_i32 = arith.constant 0 : i32
    %c0_i32_0 = arith.constant 0 : i32
    return %arg0, %c0_i32 : i32, i32
  }
  func.func @transform_3(%arg0: i32, %arg1: i32) -> (i32, i32) {
    %c0_i32 = arith.constant 0 : i32
    %c0_i32_0 = arith.constant 0 : i32
    return %arg0, %c0_i32 : i32, i32
  }
}

</mosaic_0001>

<llo_original>
// kernel: tpu_custom_call.1
$region0: #{tpu_custom_call.1}
  #allocation0 [shape = 'u32[]', space=smem, size = 0x4, offset = 0x4, fixed_abs, tag = 'smem constant byte address 0x4 - core index']
  #allocation1 [shape = 'u32[144,128]{1,0:T(1,128)}', space=vmem, size = 0x12000, scoped, tag = 'internal scratch']
  %s0 = inlined_call_operand.hbm [shape: f32[1024,128], index: 0, kind: input, shape index: {}]
  %s1 = inlined_call_operand.hbm [shape: f32[1024,128], index: 1, kind: input, shape index: {}]
  %s2 = inlined_call_operand.hbm [shape: f32[8,128], index: 2, kind: output, shape index: {0}]
  %s3 = inlined_call_operand.hbm [shape: f32[8,128], index: 3, kind: output, shape index: {1}]
  %4 = xla_tuple %s2, %s3
  %s5 = sld [smem:[#allocation0]]
  $region42: #{tpu_custom_call.1} parent=0
    _
  %s7 = ssub.s32 1, %s5
  %s8 = scalar_select 0, %s7, %s5
  $region1: #{tpu_custom_call.1} parent=0
    #allocation2 [shape = 'u8[524288]{0}', space=vmem, size = 0x80000, scoped, tag = 'input window, operand 0, single buffered']
    #allocation3 [shape = 's32[1]{0}', space=sflag, size = 0x4, scoped, tag = 'scoped memory for tpu_custom_call.1']
    #allocation4 [shape = 's32[1]{0}', space=sflag, size = 0x4, scoped, tag = 'scoped memory for tpu_custom_call.1']
    #allocation5 [shape = 'u8[524288]{0}', space=vmem, size = 0x80000, scoped, tag = 'input window, operand 1, single buffered']
    #allocation6 [shape = 's32[1]{0}', space=sflag, size = 0x4, scoped, tag = 'scoped memory for tpu_custom_call.1']
    #allocation7 [shape = 'u8[4096]{0}', space=vmem, size = 0x1000, scoped, tag = 'output window, operand 0, single buffered']
    #allocation8 [shape = 'u8[4096]{0}', space=vmem, size = 0x1000, scoped, tag = 'output window, operand 1, single buffered']
    #allocation9 [shape = 's32[1]{0}', space=sflag, size = 0x4, scoped, tag = 'scoped memory for tpu_custom_call.1']
    %9 = vsyncpa [#allocation3], 0
    %10 = vsyncpa [#allocation6], 0
    %11 = vsyncpa [#allocation4], 0
    %12 = vsyncpa [#allocation9], 0
    // Predicated region
    $region2: #{tpu_custom_call.1} parent=1 // pred_check
      _
    $region3: #{tpu_custom_call.1} parent=1 // pred_check_branch
      %14 = sbr.rel (0) target = $region5
    $region4: #{tpu_custom_call.1} parent=1 // pred_region
      %s15 = sadd.s32 0, 0
      %p16 = scmp.lt.s32.totalorder %s15, 0
      %s17 = scalar_select %p16, %s15, 0
      %s18 = smul.u32 128, %s17
      %s20 = ssub.s32 16384, 16384
      %21 = vsyncadd [#allocation3], %s20
      %s22 = smul.addr %s18, 128
      %s23 = scalar_lea.hbm %s0, %s22
      %s24 = sshll.u32 [#allocation2], 4
      %s25 = int_to_ptr.vmem [resolvable:$true] %s24
      %30 = dma.hbm_to_vmem [thread:$0]  %s23, 16384, %s25, [#allocation3], 128, 128, 8
    $region5: #{tpu_custom_call.1} parent=1 // pred_fallthru
      _
    // Predicated region
    $region6: #{tpu_custom_call.1} parent=1 // pred_check
      _
    $region7: #{tpu_custom_call.1} parent=1 // pred_check_branch
      %32 = sbr.rel (0) target = $region9
    $region8: #{tpu_custom_call.1} parent=1 // pred_region
      %s33 = sadd.s32 0, 0
      %p34 = scmp.lt.s32.totalorder %s33, 0
      %s35 = scalar_select %p34, %s33, 0
      %s36 = smul.u32 128, %s35
      %s38 = ssub.s32 16384, 16384
      %39 = vsyncadd [#allocation6], %s38
      %s40 = smul.addr %s36, 128
      %s41 = scalar_lea.hbm %s1, %s40
      %s42 = sshll.u32 [#allocation5], 4
      %s43 = int_to_ptr.vmem [resolvable:$true] %s42
      %48 = dma.hbm_to_vmem [thread:$0]  %s41, 16384, %s43, [#allocation6], 128, 128, 8
    $region9: #{tpu_custom_call.1} parent=1 // pred_fallthru
      _
    // Predicated region
    $region10: #{tpu_custom_call.1} parent=1 // pred_check
      _
    $region11: #{tpu_custom_call.1} parent=1 // pred_check_branch
      %50 = sbr.rel (0) target = $region13
    $region12: #{tpu_custom_call.1} parent=1 // pred_region
      %51 = dma.done [#allocation3], 16384
    $region13: #{tpu_custom_call.1} parent=1 // pred_fallthru
      _
    // Predicated region
    $region14: #{tpu_custom_call.1} parent=1 // pred_check
      _
    $region15: #{tpu_custom_call.1} parent=1 // pred_check_branch
      %53 = sbr.rel (0) target = $region17
    $region16: #{tpu_custom_call.1} parent=1 // pred_region
      %54 = dma.done [#allocation6], 16384
    $region17: #{tpu_custom_call.1} parent=1 // pred_fallthru
      _
    %s55 = sadd.s32 0, 0
    %p56 = scmp.lt.s32.totalorder %s55, 0
    %s57 = scalar_select %p56, %s55, 0
    %s58 = smul.u32 128, %s57
    %s59 = sadd.s32 0, 0
    %p60 = scmp.lt.s32.totalorder %s59, 0
    %s61 = scalar_select %p60, %s59, 0
    %s62 = smul.u32 128, %s61
    %s63 = sadd.s32 0, 0
    %p64 = scmp.eq.s32.totalorder 0, 0
    // Predicated region
    $region18: #{tpu_custom_call.1} parent=1 // pred_check
      %p65 = pneg %p64
    $region19: #{tpu_custom_call.1} parent=1 // pred_check_branch
      %67 = sbr.rel (%p65) target = $region21
    $region20: #{tpu_custom_call.1} parent=1 // pred_region
      %68 = vst [vmem:[#allocation7] sm:$0xff] 0.0
      %69 = vst [vmem:[#allocation8] sm:$0xff] 0.0
    $region21: #{tpu_custom_call.1} parent=1 // pred_fallthru
      _
    %v70 = vld [vmem:[#allocation2] sm:$0xff]
    %v71 = vld [vmem:[#allocation2 + $0x8] sm:$0xff]
    %v72 = vld [vmem:[#allocation2 + $0x10] sm:$0xff]
    %v73 = vld [vmem:[#allocation2 + $0x18] sm:$0xff]
    %v74 = vld [vmem:[#allocation2 + $0x20] sm:$0xff]
    %v75 = vld [vmem:[#allocation2 + $0x28] sm:$0xff]
    %v76 = vld [vmem:[#allocation2 + $0x30] sm:$0xff]
    %v77 = vld [vmem:[#allocation2 + $0x38] sm:$0xff]
    %v78 = vld [vmem:[#allocation2 + $0x40] sm:$0xff]
    %v79 = vld [vmem:[#allocation2 + $0x48] sm:$0xff]
    %v80 = vld [vmem:[#allocation2 + $0x50] sm:$0xff]
    %v81 = vld [vmem:[#allocation2 + $0x58] sm:$0xff]
    %v82 = vld [vmem:[#allocation2 + $0x60] sm:$0xff]
    %v83 = vld [vmem:[#allocation2 + $0x68] sm:$0xff]
    %v84 = vld [vmem:[#allocation2 + $0x70] sm:$0xff]
    %v85 = vld [vmem:[#allocation2 + $0x78] sm:$0xff]
    %v86 = vld [vmem:[#allocation2 + $0x80] sm:$0xff]
    %v87 = vld [vmem:[#allocation2 + $0x88] sm:$0xff]
    %v88 = vld [vmem:[#allocation2 + $0x90] sm:$0xff]
    %v89 = vld [vmem:[#allocation2 + $0x98] sm:$0xff]
    %v90 = vld [vmem:[#allocation2 + $0xa0] sm:$0xff]
    %v91 = vld [vmem:[#allocation2 + $0xa8] sm:$0xff]
    %v92 = vld [vmem:[#allocation2 + $0xb0] sm:$0xff]
    %v93 = vld [vmem:[#allocation2 + $0xb8] sm:$0xff]
    %v94 = vld [vmem:[#allocation2 + $0xc0] sm:$0xff]
    %v95 = vld [vmem:[#allocation2 + $0xc8] sm:$0xff]
    %v96 = vld [vmem:[#allocation2 + $0xd0] sm:$0xff]
    %v97 = vld [vmem:[#allocation2 + $0xd8] sm:$0xff]
    %v98 = vld [vmem:[#allocation2 + $0xe0] sm:$0xff]
    %v99 = vld [vmem:[#allocation2 + $0xe8] sm:$0xff]
    %v100 = vld [vmem:[#allocation2 + $0xf0] sm:$0xff]
    %v101 = vld [vmem:[#allocation2 + $0xf8] sm:$0xff]
    %v102 = vld [vmem:[#allocation2 + $0x100] sm:$0xff]
    %v103 = vld [vmem:[#allocation2 + $0x108] sm:$0xff]
    %v104 = vld [vmem:[#allocation2 + $0x110] sm:$0xff]
    %v105 = vld [vmem:[#allocation2 + $0x118] sm:$0xff]
    %v106 = vld [vmem:[#allocation2 + $0x120] sm:$0xff]
    %v107 = vld [vmem:[#allocation2 + $0x128] sm:$0xff]
    %v108 = vld [vmem:[#allocation2 + $0x130] sm:$0xff]
    %v109 = vld [vmem:[#allocation2 + $0x138] sm:$0xff]
    %v110 = vld [vmem:[#allocation2 + $0x140] sm:$0xff]
    %v111 = vld [vmem:[#allocation2 + $0x148] sm:$0xff]
    %v112 = vld [vmem:[#allocation2 + $0x150] sm:$0xff]
    %v113 = vld [vmem:[#allocation2 + $0x158] sm:$0xff]
    %v114 = vld [vmem:[#allocation2 + $0x160] sm:$0xff]
    %v115 = vld [vmem:[#allocation2 + $0x168] sm:$0xff]
    %v116 = vld [vmem:[#allocation2 + $0x170] sm:$0xff]
    %v117 = vld [vmem:[#allocation2 + $0x178] sm:$0xff]
    %v118 = vld [vmem:[#allocation2 + $0x180] sm:$0xff]
    %v119 = vld [vmem:[#allocation2 + $0x188] sm:$0xff]
    %v120 = vld [vmem:[#allocation2 + $0x190] sm:$0xff]
    %v121 = vld [vmem:[#allocation2 + $0x198] sm:$0xff]
    %v122 = vld [vmem:[#allocation2 + $0x1a0] sm:$0xff]
    %v123 = vld [vmem:[#allocation2 + $0x1a8] sm:$0xff]
    %v124 = vld [vmem:[#allocation2 + $0x1b0] sm:$0xff]
    %v125 = vld [vmem:[#allocation2 + $0x1b8] sm:$0xff]
    %v126 = vld [vmem:[#allocation2 + $0x1c0] sm:$0xff]
    %v127 = vld [vmem:[#allocation2 + $0x1c8] sm:$0xff]
    %v128 = vld [vmem:[#allocation2 + $0x1d0] sm:$0xff]
    %v129 = vld [vmem:[#allocation2 + $0x1d8] sm:$0xff]
    %v130 = vld [vmem:[#allocation2 + $0x1e0] sm:$0xff]
    %v131 = vld [vmem:[#allocation2 + $0x1e8] sm:$0xff]
    %v132 = vld [vmem:[#allocation2 + $0x1f0] sm:$0xff]
    %v133 = vld [vmem:[#allocation2 + $0x1f8] sm:$0xff]
    %v134 = vld [vmem:[#allocation2 + $0x200] sm:$0xff]
    %v135 = vld [vmem:[#allocation2 + $0x208] sm:$0xff]
    %v136 = vld [vmem:[#allocation2 + $0x210] sm:$0xff]
    %v137 = vld [vmem:[#allocation2 + $0x218] sm:$0xff]
    %v138 = vld [vmem:[#allocation2 + $0x220] sm:$0xff]
    %v139 = vld [vmem:[#allocation2 + $0x228] sm:$0xff]
    %v140 = vld [vmem:[#allocation2 + $0x230] sm:$0xff]
    %v141 = vld [vmem:[#allocation2 + $0x238] sm:$0xff]
    %v142 = vld [vmem:[#allocation2 + $0x240] sm:$0xff]
    %v143 = vld [vmem:[#allocation2 + $0x248] sm:$0xff]
    %v144 = vld [vmem:[#allocation2 + $0x250] sm:$0xff]
    %v145 = vld [vmem:[#allocation2 + $0x258] sm:$0xff]
    %v146 = vld [vmem:[#allocation2 + $0x260] sm:$0xff]
    %v147 = vld [vmem:[#allocation2 + $0x268] sm:$0xff]
    %v148 = vld [vmem:[#allocation2 + $0x270] sm:$0xff]
    %v149 = vld [vmem:[#allocation2 + $0x278] sm:$0xff]
    %v150 = vld [vmem:[#allocation2 + $0x280] sm:$0xff]
    %v151 = vld [vmem:[#allocation2 + $0x288] sm:$0xff]
    %v152 = vld [vmem:[#allocation2 + $0x290] sm:$0xff]
    %v153 = vld [vmem:[#allocation2 + $0x298] sm:$0xff]
    %v154 = vld [vmem:[#allocation2 + $0x2a0] sm:$0xff]
    %v155 = vld [vmem:[#allocation2 + $0x2a8] sm:$0xff]
    %v156 = vld [vmem:[#allocation2 + $0x2b0] sm:$0xff]
    %v157 = vld [vmem:[#allocation2 + $0x2b8] sm:$0xff]
    %v158 = vld [vmem:[#allocation2 + $0x2c0] sm:$0xff]
    %v159 = vld [vmem:[#allocation2 + $0x2c8] sm:$0xff]
    %v160 = vld [vmem:[#allocation2 + $0x2d0] sm:$0xff]
    %v161 = vld [vmem:[#allocation2 + $0x2d8] sm:$0xff]
    %v162 = vld [vmem:[#allocation2 + $0x2e0] sm:$0xff]
    %v163 = vld [vmem:[#allocation2 + $0x2e8] sm:$0xff]
    %v164 = vld [vmem:[#allocation2 + $0x2f0] sm:$0xff]
    %v165 = vld [vmem:[#allocation2 + $0x2f8] sm:$0xff]
    %v166 = vld [vmem:[#allocation2 + $0x300] sm:$0xff]
    %v167 = vld [vmem:[#allocation2 + $0x308] sm:$0xff]
    %v168 = vld [vmem:[#allocation2 + $0x310] sm:$0xff]
    %v169 = vld [vmem:[#allocation2 + $0x318] sm:$0xff]
    %v170 = vld [vmem:[#allocation2 + $0x320] sm:$0xff]
    %v171 = vld [vmem:[#allocation2 + $0x328] sm:$0xff]
    %v172 = vld [vmem:[#allocation2 + $0x330] sm:$0xff]
    %v173 = vld [vmem:[#allocation2 + $0x338] sm:$0xff]
    %v174 = vld [vmem:[#allocation2 + $0x340] sm:$0xff]
    %v175 = vld [vmem:[#allocation2 + $0x348] sm:$0xff]
    %v176 = vld [vmem:[#allocation2 + $0x350] sm:$0xff]
    %v177 = vld [vmem:[#allocation2 + $0x358] sm:$0xff]
    %v178 = vld [vmem:[#allocation2 + $0x360] sm:$0xff]
    %v179 = vld [vmem:[#allocation2 + $0x368] sm:$0xff]
    %v180 = vld [vmem:[#allocation2 + $0x370] sm:$0xff]
    %v181 = vld [vmem:[#allocation2 + $0x378] sm:$0xff]
    %v182 = vld [vmem:[#allocation2 + $0x380] sm:$0xff]
    %v183 = vld [vmem:[#allocation2 + $0x388] sm:$0xff]
    %v184 = vld [vmem:[#allocation2 + $0x390] sm:$0xff]
    %v185 = vld [vmem:[#allocation2 + $0x398] sm:$0xff]
    %v186 = vld [vmem:[#allocation2 + $0x3a0] sm:$0xff]
    %v187 = vld [vmem:[#allocation2 + $0x3a8] sm:$0xff]
    %v188 = vld [vmem:[#allocation2 + $0x3b0] sm:$0xff]
    %v189 = vld [vmem:[#allocation2 + $0x3b8] sm:$0xff]
    %v190 = vld [vmem:[#allocation2 + $0x3c0] sm:$0xff]
    %v191 = vld [vmem:[#allocation2 + $0x3c8] sm:$0xff]
    %v192 = vld [vmem:[#allocation2 + $0x3d0] sm:$0xff]
    %v193 = vld [vmem:[#allocation2 + $0x3d8] sm:$0xff]
    %v194 = vld [vmem:[#allocation2 + $0x3e0] sm:$0xff]
    %v195 = vld [vmem:[#allocation2 + $0x3e8] sm:$0xff]
    %v196 = vld [vmem:[#allocation2 + $0x3f0] sm:$0xff]
    %v197 = vld [vmem:[#allocation2 + $0x3f8] sm:$0xff]
    %v198 = vld [vmem:[#allocation5] sm:$0xff]
    %v199 = vld [vmem:[#allocation5 + $0x8] sm:$0xff]
    %v200 = vld [vmem:[#allocation5 + $0x10] sm:$0xff]
    %v201 = vld [vmem:[#allocation5 + $0x18] sm:$0xff]
    %v202 = vld [vmem:[#allocation5 + $0x20] sm:$0xff]
    %v203 = vld [vmem:[#allocation5 + $0x28] sm:$0xff]
    %v204 = vld [vmem:[#allocation5 + $0x30] sm:$0xff]
    %v205 = vld [vmem:[#allocation5 + $0x38] sm:$0xff]
    %v206 = vld [vmem:[#allocation5 + $0x40] sm:$0xff]
    %v207 = vld [vmem:[#allocation5 + $0x48] sm:$0xff]
    %v208 = vld [vmem:[#allocation5 + $0x50] sm:$0xff]
    %v209 = vld [vmem:[#allocation5 + $0x58] sm:$0xff]
    %v210 = vld [vmem:[#allocation5 + $0x60] sm:$0xff]
    %v211 = vld [vmem:[#allocation5 + $0x68] sm:$0xff]
    %v212 = vld [vmem:[#allocation5 + $0x70] sm:$0xff]
    %v213 = vld [vmem:[#allocation5 + $0x78] sm:$0xff]
    %v214 = vld [vmem:[#allocation5 + $0x80] sm:$0xff]
    %v215 = vld [vmem:[#allocation5 + $0x88] sm:$0xff]
    %v216 = vld [vmem:[#allocation5 + $0x90] sm:$0xff]
    %v217 = vld [vmem:[#allocation5 + $0x98] sm:$0xff]
    %v218 = vld [vmem:[#allocation5 + $0xa0] sm:$0xff]
    %v219 = vld [vmem:[#allocation5 + $0xa8] sm:$0xff]
    %v220 = vld [vmem:[#allocation5 + $0xb0] sm:$0xff]
    %v221 = vld [vmem:[#allocation5 + $0xb8] sm:$0xff]
    %v222 = vld [vmem:[#allocation5 + $0xc0] sm:$0xff]
    %v223 = vld [vmem:[#allocation5 + $0xc8] sm:$0xff]
    %v224 = vld [vmem:[#allocation5 + $0xd0] sm:$0xff]
    %v225 = vld [vmem:[#allocation5 + $0xd8] sm:$0xff]
    %v226 = vld [vmem:[#allocation5 + $0xe0] sm:$0xff]
    %v227 = vld [vmem:[#allocation5 + $0xe8] sm:$0xff]
    %v228 = vld [vmem:[#allocation5 + $0xf0] sm:$0xff]
    %v229 = vld [vmem:[#allocation5 + $0xf8] sm:$0xff]
    %v230 = vld [vmem:[#allocation5 + $0x100] sm:$0xff]
    %v231 = vld [vmem:[#allocation5 + $0x108] sm:$0xff]
    %v232 = vld [vmem:[#allocation5 + $0x110] sm:$0xff]
    %v233 = vld [vmem:[#allocation5 + $0x118] sm:$0xff]
    %v234 = vld [vmem:[#allocation5 + $0x120] sm:$0xff]
    %v235 = vld [vmem:[#allocation5 + $0x128] sm:$0xff]
    %v236 = vld [vmem:[#allocation5 + $0x130] sm:$0xff]
    %v237 = vld [vmem:[#allocation5 + $0x138] sm:$0xff]
    %v238 = vld [vmem:[#allocation5 + $0x140] sm:$0xff]
    %v239 = vld [vmem:[#allocation5 + $0x148] sm:$0xff]
    %v240 = vld [vmem:[#allocation5 + $0x150] sm:$0xff]
    %v241 = vld [vmem:[#allocation5 + $0x158] sm:$0xff]
    %v242 = vld [vmem:[#allocation5 + $0x160] sm:$0xff]
    %v243 = vld [vmem:[#allocation5 + $0x168] sm:$0xff]
    %v244 = vld [vmem:[#allocation5 + $0x170] sm:$0xff]
    %v245 = vld [vmem:[#allocation5 + $0x178] sm:$0xff]
    %v246 = vld [vmem:[#allocation5 + $0x180] sm:$0xff]
    %v247 = vld [vmem:[#allocation5 + $0x188] sm:$0xff]
    %v248 = vld [vmem:[#allocation5 + $0x190] sm:$0xff]
    %v249 = vld [vmem:[#allocation5 + $0x198] sm:$0xff]
    %v250 = vld [vmem:[#allocation5 + $0x1a0] sm:$0xff]
    %v251 = vld [vmem:[#allocation5 + $0x1a8] sm:$0xff]
    %v252 = vld [vmem:[#allocation5 + $0x1b0] sm:$0xff]
    %v253 = vld [vmem:[#allocation5 + $0x1b8] sm:$0xff]
    %v254 = vld [vmem:[#allocation5 + $0x1c0] sm:$0xff]
    %v255 = vld [vmem:[#allocation5 + $0x1c8] sm:$0xff]
    %v256 = vld [vmem:[#allocation5 + $0x1d0] sm:$0xff]
    %v257 = vld [vmem:[#allocation5 + $0x1d8] sm:$0xff]
    %v258 = vld [vmem:[#allocation5 + $0x1e0] sm:$0xff]
    %v259 = vld [vmem:[#allocation5 + $0x1e8] sm:$0xff]
    %v260 = vld [vmem:[#allocation5 + $0x1f0] sm:$0xff]
    %v261 = vld [vmem:[#allocation5 + $0x1f8] sm:$0xff]
    %v262 = vld [vmem:[#allocation5 + $0x200] sm:$0xff]
    %v263 = vld [vmem:[#allocation5 + $0x208] sm:$0xff]
    %v264 = vld [vmem:[#allocation5 + $0x210] sm:$0xff]
    %v265 = vld [vmem:[#allocation5 + $0x218] sm:$0xff]
    %v266 = vld [vmem:[#allocation5 + $0x220] sm:$0xff]
    %v267 = vld [vmem:[#allocation5 + $0x228] sm:$0xff]
    %v268 = vld [vmem:[#allocation5 + $0x230] sm:$0xff]
    %v269 = vld [vmem:[#allocation5 + $0x238] sm:$0xff]
    %v270 = vld [vmem:[#allocation5 + $0x240] sm:$0xff]
    %v271 = vld [vmem:[#allocation5 + $0x248] sm:$0xff]
    %v272 = vld [vmem:[#allocation5 + $0x250] sm:$0xff]
    %v273 = vld [vmem:[#allocation5 + $0x258] sm:$0xff]
    %v274 = vld [vmem:[#allocation5 + $0x260] sm:$0xff]
    %v275 = vld [vmem:[#allocation5 + $0x268] sm:$0xff]
    %v276 = vld [vmem:[#allocation5 + $0x270] sm:$0xff]
    %v277 = vld [vmem:[#allocation5 + $0x278] sm:$0xff]
    %v278 = vld [vmem:[#allocation5 + $0x280] sm:$0xff]
    %v279 = vld [vmem:[#allocation5 + $0x288] sm:$0xff]
    %v280 = vld [vmem:[#allocation5 + $0x290] sm:$0xff]
    %v281 = vld [vmem:[#allocation5 + $0x298] sm:$0xff]
    %v282 = vld [vmem:[#allocation5 + $0x2a0] sm:$0xff]
    %v283 = vld [vmem:[#allocation5 + $0x2a8] sm:$0xff]
    %v284 = vld [vmem:[#allocation5 + $0x2b0] sm:$0xff]
    %v285 = vld [vmem:[#allocation5 + $0x2b8] sm:$0xff]
    %v286 = vld [vmem:[#allocation5 + $0x2c0] sm:$0xff]
    %v287 = vld [vmem:[#allocation5 + $0x2c8] sm:$0xff]
    %v288 = vld [vmem:[#allocation5 + $0x2d0] sm:$0xff]
    %v289 = vld [vmem:[#allocation5 + $0x2d8] sm:$0xff]
    %v290 = vld [vmem:[#allocation5 + $0x2e0] sm:$0xff]
    %v291 = vld [vmem:[#allocation5 + $0x2e8] sm:$0xff]
    %v292 = vld [vmem:[#allocation5 + $0x2f0] sm:$0xff]
    %v293 = vld [vmem:[#allocation5 + $0x2f8] sm:$0xff]
    %v294 = vld [vmem:[#allocation5 + $0x300] sm:$0xff]
    %v295 = vld [vmem:[#allocation5 + $0x308] sm:$0xff]
    %v296 = vld [vmem:[#allocation5 + $0x310] sm:$0xff]
    %v297 = vld [vmem:[#allocation5 + $0x318] sm:$0xff]
    %v298 = vld [vmem:[#allocation5 + $0x320] sm:$0xff]
    %v299 = vld [vmem:[#allocation5 + $0x328] sm:$0xff]
    %v300 = vld [vmem:[#allocation5 + $0x330] sm:$0xff]
    %v301 = vld [vmem:[#allocation5 + $0x338] sm:$0xff]
    %v302 = vld [vmem:[#allocation5 + $0x340] sm:$0xff]
    %v303 = vld [vmem:[#allocation5 + $0x348] sm:$0xff]
    %v304 = vld [vmem:[#allocation5 + $0x350] sm:$0xff]
    %v305 = vld [vmem:[#allocation5 + $0x358] sm:$0xff]
    %v306 = vld [vmem:[#allocation5 + $0x360] sm:$0xff]
    %v307 = vld [vmem:[#allocation5 + $0x368] sm:$0xff]
    %v308 = vld [vmem:[#allocation5 + $0x370] sm:$0xff]
    %v309 = vld [vmem:[#allocation5 + $0x378] sm:$0xff]
    %v310 = vld [vmem:[#allocation5 + $0x380] sm:$0xff]
    %v311 = vld [vmem:[#allocation5 + $0x388] sm:$0xff]
    %v312 = vld [vmem:[#allocation5 + $0x390] sm:$0xff]
    %v313 = vld [vmem:[#allocation5 + $0x398] sm:$0xff]
    %v314 = vld [vmem:[#allocation5 + $0x3a0] sm:$0xff]
    %v315 = vld [vmem:[#allocation5 + $0x3a8] sm:$0xff]
    %v316 = vld [vmem:[#allocation5 + $0x3b0] sm:$0xff]
    %v317 = vld [vmem:[#allocation5 + $0x3b8] sm:$0xff]
    %v318 = vld [vmem:[#allocation5 + $0x3c0] sm:$0xff]
    %v319 = vld [vmem:[#allocation5 + $0x3c8] sm:$0xff]
    %v320 = vld [vmem:[#allocation5 + $0x3d0] sm:$0xff]
    %v321 = vld [vmem:[#allocation5 + $0x3d8] sm:$0xff]
    %v322 = vld [vmem:[#allocation5 + $0x3e0] sm:$0xff]
    %v323 = vld [vmem:[#allocation5 + $0x3e8] sm:$0xff]
    %v324 = vld [vmem:[#allocation5 + $0x3f0] sm:$0xff]
    %v325 = vld [vmem:[#allocation5 + $0x3f8] sm:$0xff]
    %v326 = vxor.u32 %v70, 2147483648
    %v327 = vxor.u32 %v71, 2147483648
    %v328 = vxor.u32 %v72, 2147483648
    %v329 = vxor.u32 %v73, 2147483648
    %v330 = vxor.u32 %v74, 2147483648
    %v331 = vxor.u32 %v75, 2147483648
    %v332 = vxor.u32 %v76, 2147483648
    %v333 = vxor.u32 %v77, 2147483648
    %v334 = vxor.u32 %v78, 2147483648
    %v335 = vxor.u32 %v79, 2147483648
    %v336 = vxor.u32 %v80, 2147483648
    %v337 = vxor.u32 %v81, 2147483648
    %v338 = vxor.u32 %v82, 2147483648
    %v339 = vxor.u32 %v83, 2147483648
    %v340 = vxor.u32 %v84, 2147483648
    %v341 = vxor.u32 %v85, 2147483648
    %v342 = vxor.u32 %v86, 2147483648
    %v343 = vxor.u32 %v87, 2147483648
    %v344 = vxor.u32 %v88, 2147483648
    %v345 = vxor.u32 %v89, 2147483648
    %v346 = vxor.u32 %v90, 2147483648
    %v347 = vxor.u32 %v91, 2147483648
    %v348 = vxor.u32 %v92, 2147483648
    %v349 = vxor.u32 %v93, 2147483648
    %v350 = vxor.u32 %v94, 2147483648
    %v351 = vxor.u32 %v95, 2147483648
    %v352 = vxor.u32 %v96, 2147483648
    %v353 = vxor.u32 %v97, 2147483648
    %v354 = vxor.u32 %v98, 2147483648
    %v355 = vxor.u32 %v99, 2147483648
    %v356 = vxor.u32 %v100, 2147483648
    %v357 = vxor.u32 %v101, 2147483648
    %v358 = vxor.u32 %v102, 2147483648
    %v359 = vxor.u32 %v103, 2147483648
    %v360 = vxor.u32 %v104, 2147483648
    %v361 = vxor.u32 %v105, 2147483648
    %v362 = vxor.u32 %v106, 2147483648
    %v363 = vxor.u32 %v107, 2147483648
    %v364 = vxor.u32 %v108, 2147483648
    %v365 = vxor.u32 %v109, 2147483648
    %v366 = vxor.u32 %v110, 2147483648
    %v367 = vxor.u32 %v111, 2147483648
    %v368 = vxor.u32 %v112, 2147483648
    %v369 = vxor.u32 %v113, 2147483648
    %v370 = vxor.u32 %v114, 2147483648
    %v371 = vxor.u32 %v115, 2147483648
    %v372 = vxor.u32 %v116, 2147483648
    %v373 = vxor.u32 %v117, 2147483648
    %v374 = vxor.u32 %v118, 2147483648
    %v375 = vxor.u32 %v119, 2147483648
    %v376 = vxor.u32 %v120, 2147483648
    %v377 = vxor.u32 %v121, 2147483648
    %v378 = vxor.u32 %v122, 2147483648
    %v379 = vxor.u32 %v123, 2147483648
    %v380 = vxor.u32 %v124, 2147483648
    %v381 = vxor.u32 %v125, 2147483648
    %v382 = vxor.u32 %v126, 2147483648
    %v383 = vxor.u32 %v127, 2147483648
    %v384 = vxor.u32 %v128, 2147483648
    %v385 = vxor.u32 %v129, 2147483648
    %v386 = vxor.u32 %v130, 2147483648
    %v387 = vxor.u32 %v131, 2147483648
    %v388 = vxor.u32 %v132, 2147483648
    %v389 = vxor.u32 %v133, 2147483648
    %v390 = vxor.u32 %v134, 2147483648
    %v391 = vxor.u32 %v135, 2147483648
    %v392 = vxor.u32 %v136, 2147483648
    %v393 = vxor.u32 %v137, 2147483648
    %v394 = vxor.u32 %v138, 2147483648
    %v395 = vxor.u32 %v139, 2147483648
    %v396 = vxor.u32 %v140, 2147483648
    %v397 = vxor.u32 %v141, 2147483648
    %v398 = vxor.u32 %v142, 2147483648
    %v399 = vxor.u32 %v143, 2147483648
    %v400 = vxor.u32 %v144, 2147483648
    %v401 = vxor.u32 %v145, 2147483648
    %v402 = vxor.u32 %v146, 2147483648
    %v403 = vxor.u32 %v147, 2147483648
    %v404 = vxor.u32 %v148, 2147483648
    %v405 = vxor.u32 %v149, 2147483648
    %v406 = vxor.u32 %v150, 2147483648
    %v407 = vxor.u32 %v151, 2147483648
    %v408 = vxor.u32 %v152, 2147483648
    %v409 = vxor.u32 %v153, 2147483648
    %v410 = vxor.u32 %v154, 2147483648
    %v411 = vxor.u32 %v155, 2147483648
    %v412 = vxor.u32 %v156, 2147483648
    %v413 = vxor.u32 %v157, 2147483648
    %v414 = vxor.u32 %v158, 2147483648
    %v415 = vxor.u32 %v159, 2147483648
    %v416 = vxor.u32 %v160, 2147483648
    %v417 = vxor.u32 %v161, 2147483648
    %v418 = vxor.u32 %v162, 2147483648
    %v419 = vxor.u32 %v163, 2147483648
    %v420 = vxor.u32 %v164, 2147483648
    %v421 = vxor.u32 %v165, 2147483648
    %v422 = vxor.u32 %v166, 2147483648
    %v423 = vxor.u32 %v167, 2147483648
    %v424 = vxor.u32 %v168, 2147483648
    %v425 = vxor.u32 %v169, 2147483648
    %v426 = vxor.u32 %v170, 2147483648
    %v427 = vxor.u32 %v171, 2147483648
    %v428 = vxor.u32 %v172, 2147483648
    %v429 = vxor.u32 %v173, 2147483648
    %v430 = vxor.u32 %v174, 2147483648
    %v431 = vxor.u32 %v175, 2147483648
    %v432 = vxor.u32 %v176, 2147483648
    %v433 = vxor.u32 %v177, 2147483648
    %v434 = vxor.u32 %v178, 2147483648
    %v435 = vxor.u32 %v179, 2147483648
    %v436 = vxor.u32 %v180, 2147483648
    %v437 = vxor.u32 %v181, 2147483648
    %v438 = vxor.u32 %v182, 2147483648
    %v439 = vxor.u32 %v183, 2147483648
    %v440 = vxor.u32 %v184, 2147483648
    %v441 = vxor.u32 %v185, 2147483648
    %v442 = vxor.u32 %v186, 2147483648
    %v443 = vxor.u32 %v187, 2147483648
    %v444 = vxor.u32 %v188, 2147483648
    %v445 = vxor.u32 %v189, 2147483648
    %v446 = vxor.u32 %v190, 2147483648
    %v447 = vxor.u32 %v191, 2147483648
    %v448 = vxor.u32 %v192, 2147483648
    %v449 = vxor.u32 %v193, 2147483648
    %v450 = vxor.u32 %v194, 2147483648
    %v451 = vxor.u32 %v195, 2147483648
    %v452 = vxor.u32 %v196, 2147483648
    %v453 = vxor.u32 %v197, 2147483648
    %v454 = vmul.f32 %v326, 1.442695
    %v455 = vpow.pop %v454
    %v456 = vmul.f32 %v327, 1.442695
    %v457 = vpow.pop %v456
    %v458 = vmul.f32 %v328, 1.442695
    %v459 = vpow.pop %v458
    %v460 = vmul.f32 %v329, 1.442695
    %v461 = vpow.pop %v460
    %v462 = vmul.f32 %v330, 1.442695
    %v463 = vpow.pop %v462
    %v464 = vmul.f32 %v331, 1.442695
    %v465 = vpow.pop %v464
    %v466 = vmul.f32 %v332, 1.442695
    %v467 = vpow.pop %v466
    %v468 = vmul.f32 %v333, 1.442695
    %v469 = vpow.pop %v468
    %v470 = vmul.f32 %v334, 1.442695
    %v471 = vpow.pop %v470
    %v472 = vmul.f32 %v335, 1.442695
    %v473 = vpow.pop %v472
    %v474 = vmul.f32 %v336, 1.442695
    %v475 = vpow.pop %v474
    %v476 = vmul.f32 %v337, 1.442695
    %v477 = vpow.pop %v476
    %v478 = vmul.f32 %v338, 1.442695
    %v479 = vpow.pop %v478
    %v480 = vmul.f32 %v339, 1.442695
    %v481 = vpow.pop %v480
    %v482 = vmul.f32 %v340, 1.442695
    %v483 = vpow.pop %v482
    %v484 = vmul.f32 %v341, 1.442695
    %v485 = vpow.pop %v484
    %v486 = vmul.f32 %v342, 1.442695
    %v487 = vpow.pop %v486
    %v488 = vmul.f32 %v343, 1.442695
    %v489 = vpow.pop %v488
    %v490 = vmul.f32 %v344, 1.442695
    %v491 = vpow.pop %v490
    %v492 = vmul.f32 %v345, 1.442695
    %v493 = vpow.pop %v492
    %v494 = vmul.f32 %v346, 1.442695
    %v495 = vpow.pop %v494
    %v496 = vmul.f32 %v347, 1.442695
    %v497 = vpow.pop %v496
    %v498 = vmul.f32 %v348, 1.442695
    %v499 = vpow.pop %v498
    %v500 = vmul.f32 %v349, 1.442695
    %v501 = vpow.pop %v500
    %v502 = vmul.f32 %v350, 1.442695
    %v503 = vpow.pop %v502
    %v504 = vmul.f32 %v351, 1.442695
    %v505 = vpow.pop %v504
    %v506 = vmul.f32 %v352, 1.442695
    %v507 = vpow.pop %v506
    %v508 = vmul.f32 %v353, 1.442695
    %v509 = vpow.pop %v508
    %v510 = vmul.f32 %v354, 1.442695
    %v511 = vpow.pop %v510
    %v512 = vmul.f32 %v355, 1.442695
    %v513 = vpow.pop %v512
    %v514 = vmul.f32 %v356, 1.442695
    %v515 = vpow.pop %v514
    %v516 = vmul.f32 %v357, 1.442695
    %v517 = vpow.pop %v516
    %v518 = vmul.f32 %v358, 1.442695
    %v519 = vpow.pop %v518
    %v520 = vmul.f32 %v359, 1.442695
    %v521 = vpow.pop %v520
    %v522 = vmul.f32 %v360, 1.442695
    %v523 = vpow.pop %v522
    %v524 = vmul.f32 %v361, 1.442695
    %v525 = vpow.pop %v524
    %v526 = vmul.f32 %v362, 1.442695
    %v527 = vpow.pop %v526
    %v528 = vmul.f32 %v363, 1.442695
    %v529 = vpow.pop %v528
    %v530 = vmul.f32 %v364, 1.442695
    %v531 = vpow.pop %v530
    %v532 = vmul.f32 %v365, 1.442695
    %v533 = vpow.pop %v532
    %v534 = vmul.f32 %v366, 1.442695
    %v535 = vpow.pop %v534
    %v536 = vmul.f32 %v367, 1.442695
    %v537 = vpow.pop %v536
    %v538 = vmul.f32 %v368, 1.442695
    %v539 = vpow.pop %v538
    %v540 = vmul.f32 %v369, 1.442695
    %v541 = vpow.pop %v540
    %v542 = vmul.f32 %v370, 1.442695
    %v543 = vpow.pop %v542
    %v544 = vmul.f32 %v371, 1.442695
    %v545 = vpow.pop %v544
    %v546 = vmul.f32 %v372, 1.442695
    %v547 = vpow.pop %v546
    %v548 = vmul.f32 %v373, 1.442695
    %v549 = vpow.pop %v548
    %v550 = vmul.f32 %v374, 1.442695
    %v551 = vpow.pop %v550
    %v552 = vmul.f32 %v375, 1.442695
    %v553 = vpow.pop %v552
    %v554 = vmul.f32 %v376, 1.442695
    %v555 = vpow.pop %v554
    %v556 = vmul.f32 %v377, 1.442695
    %v557 = vpow.pop %v556
    %v558 = vmul.f32 %v378, 1.442695
    %v559 = vpow.pop %v558
    %v560 = vmul.f32 %v379, 1.442695
    %v561 = vpow.pop %v560
    %v562 = vmul.f32 %v380, 1.442695
    %v563 = vpow.pop %v562
    %v564 = vmul.f32 %v381, 1.442695
    %v565 = vpow.pop %v564
    %v566 = vmul.f32 %v382, 1.442695
    %v567 = vpow.pop %v566
    %v568 = vmul.f32 %v383, 1.442695
    %v569 = vpow.pop %v568
    %v570 = vmul.f32 %v384, 1.442695
    %v571 = vpow.pop %v570
    %v572 = vmul.f32 %v385, 1.442695
    %v573 = vpow.pop %v572
    %v574 = vmul.f32 %v386, 1.442695
    %v575 = vpow.pop %v574
    %v576 = vmul.f32 %v387, 1.442695
    %v577 = vpow.pop %v576
    %v578 = vmul.f32 %v388, 1.442695
    %v579 = vpow.pop %v578
    %v580 = vmul.f32 %v389, 1.442695
    %v581 = vpow.pop %v580
    %v582 = vmul.f32 %v390, 1.442695
    %v583 = vpow.pop %v582
    %v584 = vmul.f32 %v391, 1.442695
    %v585 = vpow.pop %v584
    %v586 = vmul.f32 %v392, 1.442695
    %v587 = vpow.pop %v586
    %v588 = vmul.f32 %v393, 1.442695
    %v589 = vpow.pop %v588
    %v590 = vmul.f32 %v394, 1.442695
    %v591 = vpow.pop %v590
    %v592 = vmul.f32 %v395, 1.442695
    %v593 = vpow.pop %v592
    %v594 = vmul.f32 %v396, 1.442695
    %v595 = vpow.pop %v594
    %v596 = vmul.f32 %v397, 1.442695
    %v597 = vpow.pop %v596
    %v598 = vmul.f32 %v398, 1.442695
    %v599 = vpow.pop %v598
    %v600 = vmul.f32 %v399, 1.442695
    %v601 = vpow.pop %v600
    %v602 = vmul.f32 %v400, 1.442695
    %v603 = vpow.pop %v602
    %v604 = vmul.f32 %v401, 1.442695
    %v605 = vpow.pop %v604
    %v606 = vmul.f32 %v402, 1.442695
    %v607 = vpow.pop %v606
    %v608 = vmul.f32 %v403, 1.442695
    %v609 = vpow.pop %v608
    %v610 = vmul.f32 %v404, 1.442695
    %v611 = vpow.pop %v610
    %v612 = vmul.f32 %v405, 1.442695
    %v613 = vpow.pop %v612
    %v614 = vmul.f32 %v406, 1.442695
    %v615 = vpow.pop %v614
    %v616 = vmul.f32 %v407, 1.442695
    %v617 = vpow.pop %v616
    %v618 = vmul.f32 %v408, 1.442695
    %v619 = vpow.pop %v618
    %v620 = vmul.f32 %v409, 1.442695
    %v621 = vpow.pop %v620
    %v622 = vmul.f32 %v410, 1.442695
    %v623 = vpow.pop %v622
    %v624 = vmul.f32 %v411, 1.442695
    %v625 = vpow.pop %v624
    %v626 = vmul.f32 %v412, 1.442695
    %v627 = vpow.pop %v626
    %v628 = vmul.f32 %v413, 1.442695
    %v629 = vpow.pop %v628
    %v630 = vmul.f32 %v414, 1.442695
    %v631 = vpow.pop %v630
    %v632 = vmul.f32 %v415, 1.442695
    %v633 = vpow.pop %v632
    %v634 = vmul.f32 %v416, 1.442695
    %v635 = vpow.pop %v634
    %v636 = vmul.f32 %v417, 1.442695
    %v637 = vpow.pop %v636
    %v638 = vmul.f32 %v418, 1.442695
    %v639 = vpow.pop %v638
    %v640 = vmul.f32 %v419, 1.442695
    %v641 = vpow.pop %v640
    %v642 = vmul.f32 %v420, 1.442695
    %v643 = vpow.pop %v642
    %v644 = vmul.f32 %v421, 1.442695
    %v645 = vpow.pop %v644
    %v646 = vmul.f32 %v422, 1.442695
    %v647 = vpow.pop %v646
    %v648 = vmul.f32 %v423, 1.442695
    %v649 = vpow.pop %v648
    %v650 = vmul.f32 %v424, 1.442695
    %v651 = vpow.pop %v650
    %v652 = vmul.f32 %v425, 1.442695
    %v653 = vpow.pop %v652
    %v654 = vmul.f32 %v426, 1.442695
    %v655 = vpow.pop %v654
    %v656 = vmul.f32 %v427, 1.442695
    %v657 = vpow.pop %v656
    %v658 = vmul.f32 %v428, 1.442695
    %v659 = vpow.pop %v658
    %v660 = vmul.f32 %v429, 1.442695
    %v661 = vpow.pop %v660
    %v662 = vmul.f32 %v430, 1.442695
    %v663 = vpow.pop %v662
    %v664 = vmul.f32 %v431, 1.442695
    %v665 = vpow.pop %v664
    %v666 = vmul.f32 %v432, 1.442695
    %v667 = vpow.pop %v666
    %v668 = vmul.f32 %v433, 1.442695
    %v669 = vpow.pop %v668
    %v670 = vmul.f32 %v434, 1.442695
    %v671 = vpow.pop %v670
    %v672 = vmul.f32 %v435, 1.442695
    %v673 = vpow.pop %v672
    %v674 = vmul.f32 %v436, 1.442695
    %v675 = vpow.pop %v674
    %v676 = vmul.f32 %v437, 1.442695
    %v677 = vpow.pop %v676
    %v678 = vmul.f32 %v438, 1.442695
    %v679 = vpow.pop %v678
    %v680 = vmul.f32 %v439, 1.442695
    %v681 = vpow.pop %v680
    %v682 = vmul.f32 %v440, 1.442695
    %v683 = vpow.pop %v682
    %v684 = vmul.f32 %v441, 1.442695
    %v685 = vpow.pop %v684
    %v686 = vmul.f32 %v442, 1.442695
    %v687 = vpow.pop %v686
    %v688 = vmul.f32 %v443, 1.442695
    %v689 = vpow.pop %v688
    %v690 = vmul.f32 %v444, 1.442695
    %v691 = vpow.pop %v690
    %v692 = vmul.f32 %v445, 1.442695
    %v693 = vpow.pop %v692
    %v694 = vmul.f32 %v446, 1.442695
    %v695 = vpow.pop %v694
    %v696 = vmul.f32 %v447, 1.442695
    %v697 = vpow.pop %v696
    %v698 = vmul.f32 %v448, 1.442695
    %v699 = vpow.pop %v698
    %v700 = vmul.f32 %v449, 1.442695
    %v701 = vpow.pop %v700
    %v702 = vmul.f32 %v450, 1.442695
    %v703 = vpow.pop %v702
    %v704 = vmul.f32 %v451, 1.442695
    %v705 = vpow.pop %v704
    %v706 = vmul.f32 %v452, 1.442695
    %v707 = vpow.pop %v706
    %v708 = vmul.f32 %v453, 1.442695
    %v709 = vpow.pop %v708
    %v710 = vadd.f32 %v455, 1.0
    %v711 = vadd.f32 %v457, 1.0
    %v712 = vadd.f32 %v459, 1.0
    %v713 = vadd.f32 %v461, 1.0
    %v714 = vadd.f32 %v463, 1.0
    %v715 = vadd.f32 %v465, 1.0
    %v716 = vadd.f32 %v467, 1.0
    %v717 = vadd.f32 %v469, 1.0
    %v718 = vadd.f32 %v471, 1.0
    %v719 = vadd.f32 %v473, 1.0
    %v720 = vadd.f32 %v475, 1.0
    %v721 = vadd.f32 %v477, 1.0
    %v722 = vadd.f32 %v479, 1.0
    %v723 = vadd.f32 %v481, 1.0
    %v724 = vadd.f32 %v483, 1.0
    %v725 = vadd.f32 %v485, 1.0
    %v726 = vadd.f32 %v487, 1.0
    %v727 = vadd.f32 %v489, 1.0
    %v728 = vadd.f32 %v491, 1.0
    %v729 = vadd.f32 %v493, 1.0
    %v730 = vadd.f32 %v495, 1.0
    %v731 = vadd.f32 %v497, 1.0
    %v732 = vadd.f32 %v499, 1.0
    %v733 = vadd.f32 %v501, 1.0
    %v734 = vadd.f32 %v503, 1.0
    %v735 = vadd.f32 %v505, 1.0
    %v736 = vadd.f32 %v507, 1.0
    %v737 = vadd.f32 %v509, 1.0
    %v738 = vadd.f32 %v511, 1.0
    %v739 = vadd.f32 %v513, 1.0
    %v740 = vadd.f32 %v515, 1.0
    %v741 = vadd.f32 %v517, 1.0
    %v742 = vadd.f32 %v519, 1.0
    %v743 = vadd.f32 %v521, 1.0
    %v744 = vadd.f32 %v523, 1.0
    %v745 = vadd.f32 %v525, 1.0
    %v746 = vadd.f32 %v527, 1.0
    %v747 = vadd.f32 %v529, 1.0
    %v748 = vadd.f32 %v531, 1.0
    %v749 = vadd.f32 %v533, 1.0
    %v750 = vadd.f32 %v535, 1.0
    %v751 = vadd.f32 %v537, 1.0
    %v752 = vadd.f32 %v539, 1.0
    %v753 = vadd.f32 %v541, 1.0
    %v754 = vadd.f32 %v543, 1.0
    %v755 = vadd.f32 %v545, 1.0
    %v756 = vadd.f32 %v547, 1.0
    %v757 = vadd.f32 %v549, 1.0
    %v758 = vadd.f32 %v551, 1.0
    %v759 = vadd.f32 %v553, 1.0
    %v760 = vadd.f32 %v555, 1.0
    %v761 = vadd.f32 %v557, 1.0
    %v762 = vadd.f32 %v559, 1.0
    %v763 = vadd.f32 %v561, 1.0
    %v764 = vadd.f32 %v563, 1.0
    %v765 = vadd.f32 %v565, 1.0
    %v766 = vadd.f32 %v567, 1.0
    %v767 = vadd.f32 %v569, 1.0
    %v768 = vadd.f32 %v571, 1.0
    %v769 = vadd.f32 %v573, 1.0
    %v770 = vadd.f32 %v575, 1.0
    %v771 = vadd.f32 %v577, 1.0
    %v772 = vadd.f32 %v579, 1.0
    %v773 = vadd.f32 %v581, 1.0
    %v774 = vadd.f32 %v583, 1.0
    %v775 = vadd.f32 %v585, 1.0
    %v776 = vadd.f32 %v587, 1.0
    %v777 = vadd.f32 %v589, 1.0
    %v778 = vadd.f32 %v591, 1.0
    %v779 = vadd.f32 %v593, 1.0
    %v780 = vadd.f32 %v595, 1.0
    %v781 = vadd.f32 %v597, 1.0
    %v782 = vadd.f32 %v599, 1.0
    %v783 = vadd.f32 %v601, 1.0
    %v784 = vadd.f32 %v603, 1.0
    %v785 = vadd.f32 %v605, 1.0
    %v786 = vadd.f32 %v607, 1.0
    %v787 = vadd.f32 %v609, 1.0
    %v788 = vadd.f32 %v611, 1.0
    %v789 = vadd.f32 %v613, 1.0
    %v790 = vadd.f32 %v615, 1.0
    %v791 = vadd.f32 %v617, 1.0
    %v792 = vadd.f32 %v619, 1.0
    %v793 = vadd.f32 %v621, 1.0
    %v794 = vadd.f32 %v623, 1.0
    %v795 = vadd.f32 %v625, 1.0
    %v796 = vadd.f32 %v627, 1.0
    %v797 = vadd.f32 %v629, 1.0
    %v798 = vadd.f32 %v631, 1.0
    %v799 = vadd.f32 %v633, 1.0
    %v800 = vadd.f32 %v635, 1.0
    %v801 = vadd.f32 %v637, 1.0
    %v802 = vadd.f32 %v639, 1.0
    %v803 = vadd.f32 %v641, 1.0
    %v804 = vadd.f32 %v643, 1.0
    %v805 = vadd.f32 %v645, 1.0
    %v806 = vadd.f32 %v647, 1.0
    %v807 = vadd.f32 %v649, 1.0
    %v808 = vadd.f32 %v651, 1.0
    %v809 = vadd.f32 %v653, 1.0
    %v810 = vadd.f32 %v655, 1.0
    %v811 = vadd.f32 %v657, 1.0
    %v812 = vadd.f32 %v659, 1.0
    %v813 = vadd.f32 %v661, 1.0
    %v814 = vadd.f32 %v663, 1.0
    %v815 = vadd.f32 %v665, 1.0
    %v816 = vadd.f32 %v667, 1.0
    %v817 = vadd.f32 %v669, 1.0
    %v818 = vadd.f32 %v671, 1.0
    %v819 = vadd.f32 %v673, 1.0
    %v820 = vadd.f32 %v675, 1.0
    %v821 = vadd.f32 %v677, 1.0
    %v822 = vadd.f32 %v679, 1.0
    %v823 = vadd.f32 %v681, 1.0
    %v824 = vadd.f32 %v683, 1.0
    %v825 = vadd.f32 %v685, 1.0
    %v826 = vadd.f32 %v687, 1.0
    %v827 = vadd.f32 %v689, 1.0
    %v828 = vadd.f32 %v691, 1.0
    %v829 = vadd.f32 %v693, 1.0
    %v830 = vadd.f32 %v695, 1.0
    %v831 = vadd.f32 %v697, 1.0
    %v832 = vadd.f32 %v699, 1.0
    %v833 = vadd.f32 %v701, 1.0
    %v834 = vadd.f32 %v703, 1.0
    %v835 = vadd.f32 %v705, 1.0
    %v836 = vadd.f32 %v707, 1.0
    %v837 = vadd.f32 %v709, 1.0
    %v838 = vrcp.pop %v710
    %v839 = vmul.f32 1.0, %v838
    %v840 = vrcp.pop %v711
    %v841 = vmul.f32 1.0, %v840
    %v842 = vrcp.pop %v712
    %v843 = vmul.f32 1.0, %v842
    %v844 = vrcp.pop %v713
    %v845 = vmul.f32 1.0, %v844
    %v846 = vrcp.pop %v714
    %v847 = vmul.f32 1.0, %v846
    %v848 = vrcp.pop %v715
    %v849 = vmul.f32 1.0, %v848
    %v850 = vrcp.pop %v716
    %v851 = vmul.f32 1.0, %v850
    %v852 = vrcp.pop %v717
    %v853 = vmul.f32 1.0, %v852
    %v854 = vrcp.pop %v718
    %v855 = vmul.f32 1.0, %v854
    %v856 = vrcp.pop %v719
    %v857 = vmul.f32 1.0, %v856
    %v858 = vrcp.pop %v720
    %v859 = vmul.f32 1.0, %v858
    %v860 = vrcp.pop %v721
    %v861 = vmul.f32 1.0, %v860
    %v862 = vrcp.pop %v722
    %v863 = vmul.f32 1.0, %v862
    %v864 = vrcp.pop %v723
    %v865 = vmul.f32 1.0, %v864
    %v866 = vrcp.pop %v724
    %v867 = vmul.f32 1.0, %v866
    %v868 = vrcp.pop %v725
    %v869 = vmul.f32 1.0, %v868
    %v870 = vrcp.pop %v726
    %v871 = vmul.f32 1.0, %v870
    %v872 = vrcp.pop %v727
    %v873 = vmul.f32 1.0, %v872
    %v874 = vrcp.pop %v728
    %v875 = vmul.f32 1.0, %v874
    %v876 = vrcp.pop %v729
    %v877 = vmul.f32 1.0, %v876
    %v878 = vrcp.pop %v730
    %v879 = vmul.f32 1.0, %v878
    %v880 = vrcp.pop %v731
    %v881 = vmul.f32 1.0, %v880
    %v882 = vrcp.pop %v732
    %v883 = vmul.f32 1.0, %v882
    %v884 = vrcp.pop %v733
    %v885 = vmul.f32 1.0, %v884
    %v886 = vrcp.pop %v734
    %v887 = vmul.f32 1.0, %v886
    %v888 = vrcp.pop %v735
    %v889 = vmul.f32 1.0, %v888
    %v890 = vrcp.pop %v736
    %v891 = vmul.f32 1.0, %v890
    %v892 = vrcp.pop %v737
    %v893 = vmul.f32 1.0, %v892
    %v894 = vrcp.pop %v738
    %v895 = vmul.f32 1.0, %v894
    %v896 = vrcp.pop %v739
    %v897 = vmul.f32 1.0, %v896
    %v898 = vrcp.pop %v740
    %v899 = vmul.f32 1.0, %v898
    %v900 = vrcp.pop %v741
    %v901 = vmul.f32 1.0, %v900
    %v902 = vrcp.pop %v742
    %v903 = vmul.f32 1.0, %v902
    %v904 = vrcp.pop %v743
    %v905 = vmul.f32 1.0, %v904
    %v906 = vrcp.pop %v744
    %v907 = vmul.f32 1.0, %v906
    %v908 = vrcp.pop %v745
    %v909 = vmul.f32 1.0, %v908
    %v910 = vrcp.pop %v746
    %v911 = vmul.f32 1.0, %v910
    %v912 = vrcp.pop %v747
    %v913 = vmul.f32 1.0, %v912
    %v914 = vrcp.pop %v748
    %v915 = vmul.f32 1.0, %v914
    %v916 = vrcp.pop %v749
    %v917 = vmul.f32 1.0, %v916
    %v918 = vrcp.pop %v750
    %v919 = vmul.f32 1.0, %v918
    %v920 = vrcp.pop %v751
    %v921 = vmul.f32 1.0, %v920
    %v922 = vrcp.pop %v752
    %v923 = vmul.f32 1.0, %v922
    %v924 = vrcp.pop %v753
    %v925 = vmul.f32 1.0, %v924
    %v926 = vrcp.pop %v754
    %v927 = vmul.f32 1.0, %v926
    %v928 = vrcp.pop %v755
    %v929 = vmul.f32 1.0, %v928
    %v930 = vrcp.pop %v756
    %v931 = vmul.f32 1.0, %v930
    %v932 = vrcp.pop %v757
    %v933 = vmul.f32 1.0, %v932
    %v934 = vrcp.pop %v758
    %v935 = vmul.f32 1.0, %v934
    %v936 = vrcp.pop %v759
    %v937 = vmul.f32 1.0, %v936
    %v938 = vrcp.pop %v760
    %v939 = vmul.f32 1.0, %v938
    %v940 = vrcp.pop %v761
    %v941 = vmul.f32 1.0, %v940
    %v942 = vrcp.pop %v762
    %v943 = vmul.f32 1.0, %v942
    %v944 = vrcp.pop %v763
    %v945 = vmul.f32 1.0, %v944
    %v946 = vrcp.pop %v764
    %v947 = vmul.f32 1.0, %v946
    %v948 = vrcp.pop %v765
    %v949 = vmul.f32 1.0, %v948
    %v950 = vrcp.pop %v766
    %v951 = vmul.f32 1.0, %v950
    %v952 = vrcp.pop %v767
    %v953 = vmul.f32 1.0, %v952
    %v954 = vrcp.pop %v768
    %v955 = vmul.f32 1.0, %v954
    %v956 = vrcp.pop %v769
    %v957 = vmul.f32 1.0, %v956
    %v958 = vrcp.pop %v770
    %v959 = vmul.f32 1.0, %v958
    %v960 = vrcp.pop %v771
    %v961 = vmul.f32 1.0, %v960
    %v962 = vrcp.pop %v772
    %v963 = vmul.f32 1.0, %v962
    %v964 = vrcp.pop %v773
    %v965 = vmul.f32 1.0, %v964
    %v966 = vrcp.pop %v774
    %v967 = vmul.f32 1.0, %v966
    %v968 = vrcp.pop %v775
    %v969 = vmul.f32 1.0, %v968
    %v970 = vrcp.pop %v776
    %v971 = vmul.f32 1.0, %v970
    %v972 = vrcp.pop %v777
    %v973 = vmul.f32 1.0, %v972
    %v974 = vrcp.pop %v778
    %v975 = vmul.f32 1.0, %v974
    %v976 = vrcp.pop %v779
    %v977 = vmul.f32 1.0, %v976
    %v978 = vrcp.pop %v780
    %v979 = vmul.f32 1.0, %v978
    %v980 = vrcp.pop %v781
    %v981 = vmul.f32 1.0, %v980
    %v982 = vrcp.pop %v782
    %v983 = vmul.f32 1.0, %v982
    %v984 = vrcp.pop %v783
    %v985 = vmul.f32 1.0, %v984
    %v986 = vrcp.pop %v784
    %v987 = vmul.f32 1.0, %v986
    %v988 = vrcp.pop %v785
    %v989 = vmul.f32 1.0, %v988
    %v990 = vrcp.pop %v786
    %v991 = vmul.f32 1.0, %v990
    %v992 = vrcp.pop %v787
    %v993 = vmul.f32 1.0, %v992
    %v994 = vrcp.pop %v788
    %v995 = vmul.f32 1.0, %v994
    %v996 = vrcp.pop %v789
    %v997 = vmul.f32 1.0, %v996
    %v998 = vrcp.pop %v790
    %v999 = vmul.f32 1.0, %v998
    %v1000 = vrcp.pop %v791
    %v1001 = vmul.f32 1.0, %v1000
    %v1002 = vrcp.pop %v792
    %v1003 = vmul.f32 1.0, %v1002
    %v1004 = vrcp.pop %v793
    %v1005 = vmul.f32 1.0, %v1004
    %v1006 = vrcp.pop %v794
    %v1007 = vmul.f32 1.0, %v1006
    %v1008 = vrcp.pop %v795
    %v1009 = vmul.f32 1.0, %v1008
    %v1010 = vrcp.pop %v796
    %v1011 = vmul.f32 1.0, %v1010
    %v1012 = vrcp.pop %v797
    %v1013 = vmul.f32 1.0, %v1012
    %v1014 = vrcp.pop %v798
    %v1015 = vmul.f32 1.0, %v1014
    %v1016 = vrcp.pop %v799
    %v1017 = vmul.f32 1.0, %v1016
    %v1018 = vrcp.pop %v800
    %v1019 = vmul.f32 1.0, %v1018
    %v1020 = vrcp.pop %v801
    %v1021 = vmul.f32 1.0, %v1020
    %v1022 = vrcp.pop %v802
    %v1023 = vmul.f32 1.0, %v1022
    %v1024 = vrcp.pop %v803
    %v1025 = vmul.f32 1.0, %v1024
    %v1026 = vrcp.pop %v804
    %v1027 = vmul.f32 1.0, %v1026
    %v1028 = vrcp.pop %v805
    %v1029 = vmul.f32 1.0, %v1028
    %v1030 = vrcp.pop %v806
    %v1031 = vmul.f32 1.0, %v1030
    %v1032 = vrcp.pop %v807
    %v1033 = vmul.f32 1.0, %v1032
    %v1034 = vrcp.pop %v808
    %v1035 = vmul.f32 1.0, %v1034
    %v1036 = vrcp.pop %v809
    %v1037 = vmul.f32 1.0, %v1036
    %v1038 = vrcp.pop %v810
    %v1039 = vmul.f32 1.0, %v1038
    %v1040 = vrcp.pop %v811
    %v1041 = vmul.f32 1.0, %v1040
    %v1042 = vrcp.pop %v812
    %v1043 = vmul.f32 1.0, %v1042
    %v1044 = vrcp.pop %v813
    %v1045 = vmul.f32 1.0, %v1044
    %v1046 = vrcp.pop %v814
    %v1047 = vmul.f32 1.0, %v1046
    %v1048 = vrcp.pop %v815
    %v1049 = vmul.f32 1.0, %v1048
    %v1050 = vrcp.pop %v816
    %v1051 = vmul.f32 1.0, %v1050
    %v1052 = vrcp.pop %v817
    %v1053 = vmul.f32 1.0, %v1052
    %v1054 = vrcp.pop %v818
    %v1055 = vmul.f32 1.0, %v1054
    %v1056 = vrcp.pop %v819
    %v1057 = vmul.f32 1.0, %v1056
    %v1058 = vrcp.pop %v820
    %v1059 = vmul.f32 1.0, %v1058
    %v1060 = vrcp.pop %v821
    %v1061 = vmul.f32 1.0, %v1060
    %v1062 = vrcp.pop %v822
    %v1063 = vmul.f32 1.0, %v1062
    %v1064 = vrcp.pop %v823
    %v1065 = vmul.f32 1.0, %v1064
    %v1066 = vrcp.pop %v824
    %v1067 = vmul.f32 1.0, %v1066
    %v1068 = vrcp.pop %v825
    %v1069 = vmul.f32 1.0, %v1068
    %v1070 = vrcp.pop %v826
    %v1071 = vmul.f32 1.0, %v1070
    %v1072 = vrcp.pop %v827
    %v1073 = vmul.f32 1.0, %v1072
    %v1074 = vrcp.pop %v828
    %v1075 = vmul.f32 1.0, %v1074
    %v1076 = vrcp.pop %v829
    %v1077 = vmul.f32 1.0, %v1076
    %v1078 = vrcp.pop %v830
    %v1079 = vmul.f32 1.0, %v1078
    %v1080 = vrcp.pop %v831
    %v1081 = vmul.f32 1.0, %v1080
    %v1082 = vrcp.pop %v832
    %v1083 = vmul.f32 1.0, %v1082
    %v1084 = vrcp.pop %v833
    %v1085 = vmul.f32 1.0, %v1084
    %v1086 = vrcp.pop %v834
    %v1087 = vmul.f32 1.0, %v1086
    %v1088 = vrcp.pop %v835
    %v1089 = vmul.f32 1.0, %v1088
    %v1090 = vrcp.pop %v836
    %v1091 = vmul.f32 1.0, %v1090
    %v1092 = vrcp.pop %v837
    %v1093 = vmul.f32 1.0, %v1092
    %p1094 = scmp.lt.s32.totalorder %s63, 1
    // Predicated region
    $region22: #{tpu_custom_call.1} parent=1 // pred_check
      %p1095 = pneg %p1094
    $region23: #{tpu_custom_call.1} parent=1 // pred_check_branch
      %1097 = sbr.rel (%p1095) target = $region25
    $region24: #{tpu_custom_call.1} parent=1 // pred_region
      %v1098 = vld [vmem:[#allocation7] sm:$0xff]
      %v1099 = vmul.f32 %v839, %v198
      %v1100 = vmul.f32 %v841, %v199
      %v1101 = vmul.f32 %v843, %v200
      %v1102 = vmul.f32 %v845, %v201
      %v1103 = vmul.f32 %v847, %v202
      %v1104 = vmul.f32 %v849, %v203
      %v1105 = vmul.f32 %v851, %v204
      %v1106 = vmul.f32 %v853, %v205
      %v1107 = vmul.f32 %v855, %v206
      %v1108 = vmul.f32 %v857, %v207
      %v1109 = vmul.f32 %v859, %v208
      %v1110 = vmul.f32 %v861, %v209
      %v1111 = vmul.f32 %v863, %v210
      %v1112 = vmul.f32 %v865, %v211
      %v1113 = vmul.f32 %v867, %v212
      %v1114 = vmul.f32 %v869, %v213
      %v1115 = vmul.f32 %v871, %v214
      %v1116 = vmul.f32 %v873, %v215
      %v1117 = vmul.f32 %v875, %v216
      %v1118 = vmul.f32 %v877, %v217
      %v1119 = vmul.f32 %v879, %v218
      %v1120 = vmul.f32 %v881, %v219
      %v1121 = vmul.f32 %v883, %v220
      %v1122 = vmul.f32 %v885, %v221
      %v1123 = vmul.f32 %v887, %v222
      %v1124 = vmul.f32 %v889, %v223
      %v1125 = vmul.f32 %v891, %v224
      %v1126 = vmul.f32 %v893, %v225
      %v1127 = vmul.f32 %v895, %v226
      %v1128 = vmul.f32 %v897, %v227
      %v1129 = vmul.f32 %v899, %v228
      %v1130 = vmul.f32 %v901, %v229
      %v1131 = vmul.f32 %v903, %v230
      %v1132 = vmul.f32 %v905, %v231
      %v1133 = vmul.f32 %v907, %v232
      %v1134 = vmul.f32 %v909, %v233
      %v1135 = vmul.f32 %v911, %v234
      %v1136 = vmul.f32 %v913, %v235
      %v1137 = vmul.f32 %v915, %v236
      %v1138 = vmul.f32 %v917, %v237
      %v1139 = vmul.f32 %v919, %v238
      %v1140 = vmul.f32 %v921, %v239
      %v1141 = vmul.f32 %v923, %v240
      %v1142 = vmul.f32 %v925, %v241
      %v1143 = vmul.f32 %v927, %v242
      %v1144 = vmul.f32 %v929, %v243
      %v1145 = vmul.f32 %v931, %v244
      %v1146 = vmul.f32 %v933, %v245
      %v1147 = vmul.f32 %v935, %v246
      %v1148 = vmul.f32 %v937, %v247
      %v1149 = vmul.f32 %v939, %v248
      %v1150 = vmul.f32 %v941, %v249
      %v1151 = vmul.f32 %v943, %v250
      %v1152 = vmul.f32 %v945, %v251
      %v1153 = vmul.f32 %v947, %v252
      %v1154 = vmul.f32 %v949, %v253
      %v1155 = vmul.f32 %v951, %v254
      %v1156 = vmul.f32 %v953, %v255
      %v1157 = vmul.f32 %v955, %v256
      %v1158 = vmul.f32 %v957, %v257
      %v1159 = vmul.f32 %v959, %v258
      %v1160 = vmul.f32 %v961, %v259
      %v1161 = vmul.f32 %v963, %v260
      %v1162 = vmul.f32 %v965, %v261
      %v1163 = vmul.f32 %v967, %v262
      %v1164 = vmul.f32 %v969, %v263
      %v1165 = vmul.f32 %v971, %v264
      %v1166 = vmul.f32 %v973, %v265
      %v1167 = vmul.f32 %v975, %v266
      %v1168 = vmul.f32 %v977, %v267
      %v1169 = vmul.f32 %v979, %v268
      %v1170 = vmul.f32 %v981, %v269
      %v1171 = vmul.f32 %v983, %v270
      %v1172 = vmul.f32 %v985, %v271
      %v1173 = vmul.f32 %v987, %v272
      %v1174 = vmul.f32 %v989, %v273
      %v1175 = vmul.f32 %v991, %v274
      %v1176 = vmul.f32 %v993, %v275
      %v1177 = vmul.f32 %v995, %v276
      %v1178 = vmul.f32 %v997, %v277
      %v1179 = vmul.f32 %v999, %v278
      %v1180 = vmul.f32 %v1001, %v279
      %v1181 = vmul.f32 %v1003, %v280
      %v1182 = vmul.f32 %v1005, %v281
      %v1183 = vmul.f32 %v1007, %v282
      %v1184 = vmul.f32 %v1009, %v283
      %v1185 = vmul.f32 %v1011, %v284
      %v1186 = vmul.f32 %v1013, %v285
      %v1187 = vmul.f32 %v1015, %v286
      %v1188 = vmul.f32 %v1017, %v287
      %v1189 = vmul.f32 %v1019, %v288
      %v1190 = vmul.f32 %v1021, %v289
      %v1191 = vmul.f32 %v1023, %v290
      %v1192 = vmul.f32 %v1025, %v291
      %v1193 = vmul.f32 %v1027, %v292
      %v1194 = vmul.f32 %v1029, %v293
      %v1195 = vmul.f32 %v1031, %v294
      %v1196 = vmul.f32 %v1033, %v295
      %v1197 = vmul.f32 %v1035, %v296
      %v1198 = vmul.f32 %v1037, %v297
      %v1199 = vmul.f32 %v1039, %v298
      %v1200 = vmul.f32 %v1041, %v299
      %v1201 = vmul.f32 %v1043, %v300
      %v1202 = vmul.f32 %v1045, %v301
      %v1203 = vmul.f32 %v1047, %v302
      %v1204 = vmul.f32 %v1049, %v303
      %v1205 = vmul.f32 %v1051, %v304
      %v1206 = vmul.f32 %v1053, %v305
      %v1207 = vmul.f32 %v1055, %v306
      %v1208 = vmul.f32 %v1057, %v307
      %v1209 = vmul.f32 %v1059, %v308
      %v1210 = vmul.f32 %v1061, %v309
      %v1211 = vmul.f32 %v1063, %v310
      %v1212 = vmul.f32 %v1065, %v311
      %v1213 = vmul.f32 %v1067, %v312
      %v1214 = vmul.f32 %v1069, %v313
      %v1215 = vmul.f32 %v1071, %v314
      %v1216 = vmul.f32 %v1073, %v315
      %v1217 = vmul.f32 %v1075, %v316
      %v1218 = vmul.f32 %v1077, %v317
      %v1219 = vmul.f32 %v1079, %v318
      %v1220 = vmul.f32 %v1081, %v319
      %v1221 = vmul.f32 %v1083, %v320
      %v1222 = vmul.f32 %v1085, %v321
      %v1223 = vmul.f32 %v1087, %v322
      %v1224 = vmul.f32 %v1089, %v323
      %v1225 = vmul.f32 %v1091, %v324
      %v1226 = vmul.f32 %v1093, %v325
      %v1227 = vadd.f32 %v1099, %v1100
      %v1228 = vadd.f32 %v1227, %v1101
      %v1229 = vadd.f32 %v1228, %v1102
      %v1230 = vadd.f32 %v1229, %v1103
      %v1231 = vadd.f32 %v1230, %v1104
      %v1232 = vadd.f32 %v1231, %v1105
      %v1233 = vadd.f32 %v1232, %v1106
      %v1234 = vadd.f32 %v1233, %v1107
      %v1235 = vadd.f32 %v1234, %v1108
      %v1236 = vadd.f32 %v1235, %v1109
      %v1237 = vadd.f32 %v1236, %v1110
      %v1238 = vadd.f32 %v1237, %v1111
      %v1239 = vadd.f32 %v1238, %v1112
      %v1240 = vadd.f32 %v1239, %v1113
      %v1241 = vadd.f32 %v1240, %v1114
      %v1242 = vadd.f32 %v1241, %v1115
      %v1243 = vadd.f32 %v1242, %v1116
      %v1244 = vadd.f32 %v1243, %v1117
      %v1245 = vadd.f32 %v1244, %v1118
      %v1246 = vadd.f32 %v1245, %v1119
      %v1247 = vadd.f32 %v1246, %v1120
      %v1248 = vadd.f32 %v1247, %v1121
      %v1249 = vadd.f32 %v1248, %v1122
      %v1250 = vadd.f32 %v1249, %v1123
      %v1251 = vadd.f32 %v1250, %v1124
      %v1252 = vadd.f32 %v1251, %v1125
      %v1253 = vadd.f32 %v1252, %v1126
      %v1254 = vadd.f32 %v1253, %v1127
      %v1255 = vadd.f32 %v1254, %v1128
      %v1256 = vadd.f32 %v1255, %v1129
      %v1257 = vadd.f32 %v1256, %v1130
      %v1258 = vadd.f32 %v1257, %v1131
      %v1259 = vadd.f32 %v1258, %v1132
      %v1260 = vadd.f32 %v1259, %v1133
      %v1261 = vadd.f32 %v1260, %v1134
      %v1262 = vadd.f32 %v1261, %v1135
      %v1263 = vadd.f32 %v1262, %v1136
      %v1264 = vadd.f32 %v1263, %v1137
      %v1265 = vadd.f32 %v1264, %v1138
      %v1266 = vadd.f32 %v1265, %v1139
      %v1267 = vadd.f32 %v1266, %v1140
      %v1268 = vadd.f32 %v1267, %v1141
      %v1269 = vadd.f32 %v1268, %v1142
      %v1270 = vadd.f32 %v1269, %v1143
      %v1271 = vadd.f32 %v1270, %v1144
      %v1272 = vadd.f32 %v1271, %v1145
      %v1273 = vadd.f32 %v1272, %v1146
      %v1274 = vadd.f32 %v1273, %v1147
      %v1275 = vadd.f32 %v1274, %v1148
      %v1276 = vadd.f32 %v1275, %v1149
      %v1277 = vadd.f32 %v1276, %v1150
      %v1278 = vadd.f32 %v1277, %v1151
      %v1279 = vadd.f32 %v1278, %v1152
      %v1280 = vadd.f32 %v1279, %v1153
      %v1281 = vadd.f32 %v1280, %v1154
      %v1282 = vadd.f32 %v1281, %v1155
      %v1283 = vadd.f32 %v1282, %v1156
      %v1284 = vadd.f32 %v1283, %v1157
      %v1285 = vadd.f32 %v1284, %v1158
      %v1286 = vadd.f32 %v1285, %v1159
      %v1287 = vadd.f32 %v1286, %v1160
      %v1288 = vadd.f32 %v1287, %v1161
      %v1289 = vadd.f32 %v1288, %v1162
      %v1290 = vadd.f32 %v1289, %v1163
      %v1291 = vadd.f32 %v1290, %v1164
      %v1292 = vadd.f32 %v1291, %v1165
      %v1293 = vadd.f32 %v1292, %v1166
      %v1294 = vadd.f32 %v1293, %v1167
      %v1295 = vadd.f32 %v1294, %v1168
      %v1296 = vadd.f32 %v1295, %v1169
      %v1297 = vadd.f32 %v1296, %v1170
      %v1298 = vadd.f32 %v1297, %v1171
      %v1299 = vadd.f32 %v1298, %v1172
      %v1300 = vadd.f32 %v1299, %v1173
      %v1301 = vadd.f32 %v1300, %v1174
      %v1302 = vadd.f32 %v1301, %v1175
      %v1303 = vadd.f32 %v1302, %v1176
      %v1304 = vadd.f32 %v1303, %v1177
      %v1305 = vadd.f32 %v1304, %v1178
      %v1306 = vadd.f32 %v1305, %v1179
      %v1307 = vadd.f32 %v1306, %v1180
      %v1308 = vadd.f32 %v1307, %v1181
      %v1309 = vadd.f32 %v1308, %v1182
      %v1310 = vadd.f32 %v1309, %v1183
      %v1311 = vadd.f32 %v1310, %v1184
      %v1312 = vadd.f32 %v1311, %v1185
      %v1313 = vadd.f32 %v1312, %v1186
      %v1314 = vadd.f32 %v1313, %v1187
      %v1315 = vadd.f32 %v1314, %v1188
      %v1316 = vadd.f32 %v1315, %v1189
      %v1317 = vadd.f32 %v1316, %v1190
      %v1318 = vadd.f32 %v1317, %v1191
      %v1319 = vadd.f32 %v1318, %v1192
      %v1320 = vadd.f32 %v1319, %v1193
      %v1321 = vadd.f32 %v1320, %v1194
      %v1322 = vadd.f32 %v1321, %v1195
      %v1323 = vadd.f32 %v1322, %v1196
      %v1324 = vadd.f32 %v1323, %v1197
      %v1325 = vadd.f32 %v1324, %v1198
      %v1326 = vadd.f32 %v1325, %v1199
      %v1327 = vadd.f32 %v1326, %v1200
      %v1328 = vadd.f32 %v1327, %v1201
      %v1329 = vadd.f32 %v1328, %v1202
      %v1330 = vadd.f32 %v1329, %v1203
      %v1331 = vadd.f32 %v1330, %v1204
      %v1332 = vadd.f32 %v1331, %v1205
      %v1333 = vadd.f32 %v1332, %v1206
      %v1334 = vadd.f32 %v1333, %v1207
      %v1335 = vadd.f32 %v1334, %v1208
      %v1336 = vadd.f32 %v1335, %v1209
      %v1337 = vadd.f32 %v1336, %v1210
      %v1338 = vadd.f32 %v1337, %v1211
      %v1339 = vadd.f32 %v1338, %v1212
      %v1340 = vadd.f32 %v1339, %v1213
      %v1341 = vadd.f32 %v1340, %v1214
      %v1342 = vadd.f32 %v1341, %v1215
      %v1343 = vadd.f32 %v1342, %v1216
      %v1344 = vadd.f32 %v1343, %v1217
      %v1345 = vadd.f32 %v1344, %v1218
      %v1346 = vadd.f32 %v1345, %v1219
      %v1347 = vadd.f32 %v1346, %v1220
      %v1348 = vadd.f32 %v1347, %v1221
      %v1349 = vadd.f32 %v1348, %v1222
      %v1350 = vadd.f32 %v1349, %v1223
      %v1351 = vadd.f32 %v1350, %v1224
      %v1352 = vadd.f32 %v1351, %v1225
      %v1353 = vadd.f32 %v1352, %v1226
      %v1354 = vadd.f32 %v1098, %v1353
      %1355 = vst [vmem:[#allocation7] sm:$0xff] %v1354
      %v1356 = vld [vmem:[#allocation8] sm:$0xff]
      %v1357 = vadd.f32 %v839, %v198
      %v1358 = vadd.f32 %v841, %v199
      %v1359 = vadd.f32 %v843, %v200
      %v1360 = vadd.f32 %v845, %v201
      %v1361 = vadd.f32 %v847, %v202
      %v1362 = vadd.f32 %v849, %v203
      %v1363 = vadd.f32 %v851, %v204
      %v1364 = vadd.f32 %v853, %v205
      %v1365 = vadd.f32 %v855, %v206
      %v1366 = vadd.f32 %v857, %v207
      %v1367 = vadd.f32 %v859, %v208
      %v1368 = vadd.f32 %v861, %v209
      %v1369 = vadd.f32 %v863, %v210
      %v1370 = vadd.f32 %v865, %v211
      %v1371 = vadd.f32 %v867, %v212
      %v1372 = vadd.f32 %v869, %v213
      %v1373 = vadd.f32 %v871, %v214
      %v1374 = vadd.f32 %v873, %v215
      %v1375 = vadd.f32 %v875, %v216
      %v1376 = vadd.f32 %v877, %v217
      %v1377 = vadd.f32 %v879, %v218
      %v1378 = vadd.f32 %v881, %v219
      %v1379 = vadd.f32 %v883, %v220
      %v1380 = vadd.f32 %v885, %v221
      %v1381 = vadd.f32 %v887, %v222
      %v1382 = vadd.f32 %v889, %v223
      %v1383 = vadd.f32 %v891, %v224
      %v1384 = vadd.f32 %v893, %v225
      %v1385 = vadd.f32 %v895, %v226
      %v1386 = vadd.f32 %v897, %v227
      %v1387 = vadd.f32 %v899, %v228
      %v1388 = vadd.f32 %v901, %v229
      %v1389 = vadd.f32 %v903, %v230
      %v1390 = vadd.f32 %v905, %v231
      %v1391 = vadd.f32 %v907, %v232
      %v1392 = vadd.f32 %v909, %v233
      %v1393 = vadd.f32 %v911, %v234
      %v1394 = vadd.f32 %v913, %v235
      %v1395 = vadd.f32 %v915, %v236
      %v1396 = vadd.f32 %v917, %v237
      %v1397 = vadd.f32 %v919, %v238
      %v1398 = vadd.f32 %v921, %v239
      %v1399 = vadd.f32 %v923, %v240
      %v1400 = vadd.f32 %v925, %v241
      %v1401 = vadd.f32 %v927, %v242
      %v1402 = vadd.f32 %v929, %v243
      %v1403 = vadd.f32 %v931, %v244
      %v1404 = vadd.f32 %v933, %v245
      %v1405 = vadd.f32 %v935, %v246
      %v1406 = vadd.f32 %v937, %v247
      %v1407 = vadd.f32 %v939, %v248
      %v1408 = vadd.f32 %v941, %v249
      %v1409 = vadd.f32 %v943, %v250
      %v1410 = vadd.f32 %v945, %v251
      %v1411 = vadd.f32 %v947, %v252
      %v1412 = vadd.f32 %v949, %v253
      %v1413 = vadd.f32 %v951, %v254
      %v1414 = vadd.f32 %v953, %v255
      %v1415 = vadd.f32 %v955, %v256
      %v1416 = vadd.f32 %v957, %v257
      %v1417 = vadd.f32 %v959, %v258
      %v1418 = vadd.f32 %v961, %v259
      %v1419 = vadd.f32 %v963, %v260
      %v1420 = vadd.f32 %v965, %v261
      %v1421 = vadd.f32 %v967, %v262
      %v1422 = vadd.f32 %v969, %v263
      %v1423 = vadd.f32 %v971, %v264
      %v1424 = vadd.f32 %v973, %v265
      %v1425 = vadd.f32 %v975, %v266
      %v1426 = vadd.f32 %v977, %v267
      %v1427 = vadd.f32 %v979, %v268
      %v1428 = vadd.f32 %v981, %v269
      %v1429 = vadd.f32 %v983, %v270
      %v1430 = vadd.f32 %v985, %v271
      %v1431 = vadd.f32 %v987, %v272
      %v1432 = vadd.f32 %v989, %v273
      %v1433 = vadd.f32 %v991, %v274
      %v1434 = vadd.f32 %v993, %v275
      %v1435 = vadd.f32 %v995, %v276
      %v1436 = vadd.f32 %v997, %v277
      %v1437 = vadd.f32 %v999, %v278
      %v1438 = vadd.f32 %v1001, %v279
      %v1439 = vadd.f32 %v1003, %v280
      %v1440 = vadd.f32 %v1005, %v281
      %v1441 = vadd.f32 %v1007, %v282
      %v1442 = vadd.f32 %v1009, %v283
      %v1443 = vadd.f32 %v1011, %v284
      %v1444 = vadd.f32 %v1013, %v285
      %v1445 = vadd.f32 %v1015, %v286
      %v1446 = vadd.f32 %v1017, %v287
      %v1447 = vadd.f32 %v1019, %v288
      %v1448 = vadd.f32 %v1021, %v289
      %v1449 = vadd.f32 %v1023, %v290
      %v1450 = vadd.f32 %v1025, %v291
      %v1451 = vadd.f32 %v1027, %v292
      %v1452 = vadd.f32 %v1029, %v293
      %v1453 = vadd.f32 %v1031, %v294
      %v1454 = vadd.f32 %v1033, %v295
      %v1455 = vadd.f32 %v1035, %v296
      %v1456 = vadd.f32 %v1037, %v297
      %v1457 = vadd.f32 %v1039, %v298
      %v1458 = vadd.f32 %v1041, %v299
      %v1459 = vadd.f32 %v1043, %v300
      %v1460 = vadd.f32 %v1045, %v301
      %v1461 = vadd.f32 %v1047, %v302
      %v1462 = vadd.f32 %v1049, %v303
      %v1463 = vadd.f32 %v1051, %v304
      %v1464 = vadd.f32 %v1053, %v305
      %v1465 = vadd.f32 %v1055, %v306
      %v1466 = vadd.f32 %v1057, %v307
      %v1467 = vadd.f32 %v1059, %v308
      %v1468 = vadd.f32 %v1061, %v309
      %v1469 = vadd.f32 %v1063, %v310
      %v1470 = vadd.f32 %v1065, %v311
      %v1471 = vadd.f32 %v1067, %v312
      %v1472 = vadd.f32 %v1069, %v313
      %v1473 = vadd.f32 %v1071, %v314
      %v1474 = vadd.f32 %v1073, %v315
      %v1475 = vadd.f32 %v1075, %v316
      %v1476 = vadd.f32 %v1077, %v317
      %v1477 = vadd.f32 %v1079, %v318
      %v1478 = vadd.f32 %v1081, %v319
      %v1479 = vadd.f32 %v1083, %v320
      %v1480 = vadd.f32 %v1085, %v321
      %v1481 = vadd.f32 %v1087, %v322
      %v1482 = vadd.f32 %v1089, %v323
      %v1483 = vadd.f32 %v1091, %v324
      %v1484 = vadd.f32 %v1093, %v325
      %v1485 = vadd.f32 %v1357, %v1358
      %v1486 = vadd.f32 %v1485, %v1359
      %v1487 = vadd.f32 %v1486, %v1360
      %v1488 = vadd.f32 %v1487, %v1361
      %v1489 = vadd.f32 %v1488, %v1362
      %v1490 = vadd.f32 %v1489, %v1363
      %v1491 = vadd.f32 %v1490, %v1364
      %v1492 = vadd.f32 %v1491, %v1365
      %v1493 = vadd.f32 %v1492, %v1366
      %v1494 = vadd.f32 %v1493, %v1367
      %v1495 = vadd.f32 %v1494, %v1368
      %v1496 = vadd.f32 %v1495, %v1369
      %v1497 = vadd.f32 %v1496, %v1370
      %v1498 = vadd.f32 %v1497, %v1371
      %v1499 = vadd.f32 %v1498, %v1372
      %v1500 = vadd.f32 %v1499, %v1373
      %v1501 = vadd.f32 %v1500, %v1374
      %v1502 = vadd.f32 %v1501, %v1375
      %v1503 = vadd.f32 %v1502, %v1376
      %v1504 = vadd.f32 %v1503, %v1377
      %v1505 = vadd.f32 %v1504, %v1378
      %v1506 = vadd.f32 %v1505, %v1379
      %v1507 = vadd.f32 %v1506, %v1380
      %v1508 = vadd.f32 %v1507, %v1381
      %v1509 = vadd.f32 %v1508, %v1382
      %v1510 = vadd.f32 %v1509, %v1383
      %v1511 = vadd.f32 %v1510, %v1384
      %v1512 = vadd.f32 %v1511, %v1385
      %v1513 = vadd.f32 %v1512, %v1386
      %v1514 = vadd.f32 %v1513, %v1387
      %v1515 = vadd.f32 %v1514, %v1388
      %v1516 = vadd.f32 %v1515, %v1389
      %v1517 = vadd.f32 %v1516, %v1390
      %v1518 = vadd.f32 %v1517, %v1391
      %v1519 = vadd.f32 %v1518, %v1392
      %v1520 = vadd.f32 %v1519, %v1393
      %v1521 = vadd.f32 %v1520, %v1394
      %v1522 = vadd.f32 %v1521, %v1395
      %v1523 = vadd.f32 %v1522, %v1396
      %v1524 = vadd.f32 %v1523, %v1397
      %v1525 = vadd.f32 %v1524, %v1398
      %v1526 = vadd.f32 %v1525, %v1399
      %v1527 = vadd.f32 %v1526, %v1400
      %v1528 = vadd.f32 %v1527, %v1401
      %v1529 = vadd.f32 %v1528, %v1402
      %v1530 = vadd.f32 %v1529, %v1403
      %v1531 = vadd.f32 %v1530, %v1404
      %v1532 = vadd.f32 %v1531, %v1405
      %v1533 = vadd.f32 %v1532, %v1406
      %v1534 = vadd.f32 %v1533, %v1407
      %v1535 = vadd.f32 %v1534, %v1408
      %v1536 = vadd.f32 %v1535, %v1409
      %v1537 = vadd.f32 %v1536, %v1410
      %v1538 = vadd.f32 %v1537, %v1411
      %v1539 = vadd.f32 %v1538, %v1412
      %v1540 = vadd.f32 %v1539, %v1413
      %v1541 = vadd.f32 %v1540, %v1414
      %v1542 = vadd.f32 %v1541, %v1415
      %v1543 = vadd.f32 %v1542, %v1416
      %v1544 = vadd.f32 %v1543, %v1417
      %v1545 = vadd.f32 %v1544, %v1418
      %v1546 = vadd.f32 %v1545, %v1419
      %v1547 = vadd.f32 %v1546, %v1420
      %v1548 = vadd.f32 %v1547, %v1421
      %v1549 = vadd.f32 %v1548, %v1422
      %v1550 = vadd.f32 %v1549, %v1423
      %v1551 = vadd.f32 %v1550, %v1424
      %v1552 = vadd.f32 %v1551, %v1425
      %v1553 = vadd.f32 %v1552, %v1426
      %v1554 = vadd.f32 %v1553, %v1427
      %v1555 = vadd.f32 %v1554, %v1428
      %v1556 = vadd.f32 %v1555, %v1429
      %v1557 = vadd.f32 %v1556, %v1430
      %v1558 = vadd.f32 %v1557, %v1431
      %v1559 = vadd.f32 %v1558, %v1432
      %v1560 = vadd.f32 %v1559, %v1433
      %v1561 = vadd.f32 %v1560, %v1434
      %v1562 = vadd.f32 %v1561, %v1435
      %v1563 = vadd.f32 %v1562, %v1436
      %v1564 = vadd.f32 %v1563, %v1437
      %v1565 = vadd.f32 %v1564, %v1438
      %v1566 = vadd.f32 %v1565, %v1439
      %v1567 = vadd.f32 %v1566, %v1440
      %v1568 = vadd.f32 %v1567, %v1441
      %v1569 = vadd.f32 %v1568, %v1442
      %v1570 = vadd.f32 %v1569, %v1443
      %v1571 = vadd.f32 %v1570, %v1444
      %v1572 = vadd.f32 %v1571, %v1445
      %v1573 = vadd.f32 %v1572, %v1446
      %v1574 = vadd.f32 %v1573, %v1447
      %v1575 = vadd.f32 %v1574, %v1448
      %v1576 = vadd.f32 %v1575, %v1449
      %v1577 = vadd.f32 %v1576, %v1450
      %v1578 = vadd.f32 %v1577, %v1451
      %v1579 = vadd.f32 %v1578, %v1452
      %v1580 = vadd.f32 %v1579, %v1453
      %v1581 = vadd.f32 %v1580, %v1454
      %v1582 = vadd.f32 %v1581, %v1455
      %v1583 = vadd.f32 %v1582, %v1456
      %v1584 = vadd.f32 %v1583, %v1457
      %v1585 = vadd.f32 %v1584, %v1458
      %v1586 = vadd.f32 %v1585, %v1459
      %v1587 = vadd.f32 %v1586, %v1460
      %v1588 = vadd.f32 %v1587, %v1461
      %v1589 = vadd.f32 %v1588, %v1462
      %v1590 = vadd.f32 %v1589, %v1463
      %v1591 = vadd.f32 %v1590, %v1464
      %v1592 = vadd.f32 %v1591, %v1465
      %v1593 = vadd.f32 %v1592, %v1466
      %v1594 = vadd.f32 %v1593, %v1467
      %v1595 = vadd.f32 %v1594, %v1468
      %v1596 = vadd.f32 %v1595, %v1469
      %v1597 = vadd.f32 %v1596, %v1470
      %v1598 = vadd.f32 %v1597, %v1471
      %v1599 = vadd.f32 %v1598, %v1472
      %v1600 = vadd.f32 %v1599, %v1473
      %v1601 = vadd.f32 %v1600, %v1474
      %v1602 = vadd.f32 %v1601, %v1475
      %v1603 = vadd.f32 %v1602, %v1476
      %v1604 = vadd.f32 %v1603, %v1477
      %v1605 = vadd.f32 %v1604, %v1478
      %v1606 = vadd.f32 %v1605, %v1479
      %v1607 = vadd.f32 %v1606, %v1480
      %v1608 = vadd.f32 %v1607, %v1481
      %v1609 = vadd.f32 %v1608, %v1482
      %v1610 = vadd.f32 %v1609, %v1483
      %v1611 = vadd.f32 %v1610, %v1484
      %v1612 = vadd.f32 %v1356, %v1611
      %1613 = vst [vmem:[#allocation8] sm:$0xff] %v1612
    $region25: #{tpu_custom_call.1} parent=1 // pred_fallthru
      _
    // Predicated region
    $region26: #{tpu_custom_call.1} parent=1 // pred_check
      _
    $region27: #{tpu_custom_call.1} parent=1 // pred_check_branch
      %1615 = sbr.rel (0) target = $region29
    $region28: #{tpu_custom_call.1} parent=1 // pred_region
      %s1617 = ssub.s32 128, 128
      %1618 = vsyncadd [#allocation4], %s1617
      %s1620 = sshll.u32 [#allocation7], 4
      %s1621 = int_to_ptr.vmem [resolvable:$true] %s1620
      %1623 = dma.vmem_to_hbm [thread:$0]  %s1621, 128, %s2, [#allocation4]
    $region29: #{tpu_custom_call.1} parent=1 // pred_fallthru
      _
    // Predicated region
    $region30: #{tpu_custom_call.1} parent=1 // pred_check
      _
    $region31: #{tpu_custom_call.1} parent=1 // pred_check_branch
      %1625 = sbr.rel (0) target = $region33
    $region32: #{tpu_custom_call.1} parent=1 // pred_region
      %s1627 = ssub.s32 128, 128
      %1628 = vsyncadd [#allocation9], %s1627
      %s1630 = sshll.u32 [#allocation8], 4
      %s1631 = int_to_ptr.vmem [resolvable:$true] %s1630
      %1633 = dma.vmem_to_hbm [thread:$0]  %s1631, 128, %s3, [#allocation9]
    $region33: #{tpu_custom_call.1} parent=1 // pred_fallthru
      _
    // Predicated region
    $region34: #{tpu_custom_call.1} parent=1 // pred_check
      _
    $region35: #{tpu_custom_call.1} parent=1 // pred_check_branch
      %1635 = sbr.rel (0) target = $region37
    $region36: #{tpu_custom_call.1} parent=1 // pred_region
      %1636 = dma.done [#allocation4], 128
    $region37: #{tpu_custom_call.1} parent=1 // pred_fallthru
      _
    // Predicated region
    $region38: #{tpu_custom_call.1} parent=1 // pred_check
      _
    $region39: #{tpu_custom_call.1} parent=1 // pred_check_branch
      %1638 = sbr.rel (0) target = $region41
    $region40: #{tpu_custom_call.1} parent=1 // pred_region
      %1639 = dma.done [#allocation9], 128
    $region41: #{tpu_custom_call.1} parent=1 // pred_fallthru
      _
    %1640 = vsyncpa [#allocation3], 1
    %1641 = vsyncpa [#allocation6], 1
    %1642 = vsyncpa [#allocation4], 1
    %1643 = vsyncpa [#allocation9], 1

</llo_original>
